<compile_context>
chip_gen: v7x
topology: tpu7x:2x2x1
jax: 0.10.0
libtpu: 0.0.40
codegen_flags: <defaults>
</compile_context>

<pallas_src>
import jax
import jax.numpy as jnp
from jax.experimental import pallas as pl
from jax.experimental.pallas import tpu as pltpu


def _round_up(n, m):
    return ((n + m - 1) // m) * m


def _lstm_fc_kernel(x_ref, wx_ref, wh_ref, wfc_ref, bfc_ref, out_ref, xproj_ref):
    # x_ref    : (1, T*BB, DP) bf16  this batch block, time-major; ones column
    #                                at feature index D (bias), lane-padded
    # wx_ref   : (DP, 4*HP)    bf16  fused input->gate weights [i|f|g|o];
    #                                row D holds b_ih+b_hh; i/f/o pre-scaled 0.5
    # wh_ref   : (HP, 4*HP)    bf16  fused hidden->gate weights, i/f/o pre-scaled 0.5
    # wfc_ref  : (1, HP)       f32   fc weight row, zero-padded
    # bfc_ref  : (1, 1)        f32   fc bias
    # out_ref  : (1, BB, 128)  f32   fc(h_T) broadcast across lanes (lane-dense)
    # xproj_ref: (T*BB, 4*HP)  f32   VMEM scratch for the hoisted input GEMM
    BB = out_ref.shape[1]
    HP = wh_ref.shape[0]
    T = xproj_ref.shape[0] // BB

    # Hoisted input projection for ALL timesteps (bias folded in via the ones
    # column), staged to VMEM so it is not held in vregs across the unrolled
    # recurrence.
    xproj_ref[...] = jnp.dot(x_ref[0], wx_ref[...],
                             preferred_element_type=jnp.float32)

    wh = wh_ref[...]                                   # loop-invariant, bf16
    # TODO(synk): pltpu.matmul_push_rhs/_acc_lhs/_pop could keep Wh resident in
    # the MXU across the T steps (avoids per-step RHS restage); kept as jnp.dot
    # here for portability/robustness.
    c = jnp.zeros((BB, HP), jnp.float32)
    h = None                                           # h0 == 0 -> skip first matmul
    for t in range(T):                                 # T static: fully unrolled
        g = xproj_ref[t * BB:(t + 1) * BB, :]          # (BB, 4*HP) f32, aligned slice
        if t > 0:
            g = g + jnp.dot(h, wh, preferred_element_type=jnp.float32)
        # sigmoid(z) = 0.5 + 0.5*tanh(z/2); the /2 is pre-folded into wx/wh/bias.
        i_g = 0.5 * jnp.tanh(g[:, 0 * HP:1 * HP]) + 0.5
        f_g = 0.5 * jnp.tanh(g[:, 1 * HP:2 * HP]) + 0.5
        g_g = jnp.tanh(g[:, 2 * HP:3 * HP])
        o_g = 0.5 * jnp.tanh(g[:, 3 * HP:4 * HP]) + 0.5
        c = f_g * c + i_g * g_g                        # f32 elementwise
        h = (o_g * jnp.tanh(c)).astype(jnp.bfloat16)   # bf16: dtype the next matmul needs

    # Final fc: VPU multiply + lane reduction (no N=1 MXU matmul), lane-dense store.
    y = jnp.sum(h.astype(jnp.float32) * wfc_ref[...], axis=-1,
                keepdims=True) + bfc_ref[...]          # (BB, 1)
    out_ref[0] = jnp.broadcast_to(y, (BB, 128))


def init_params(key, input_size, hidden_size):
    """Deterministic init mirroring PyTorch nn.LSTM / nn.Linear shapes."""
    H, D = hidden_size, input_size
    k = 1.0 / jnp.sqrt(jnp.float32(H))
    ks = jax.random.split(key, 6)
    u = lambda kk, shape, bound: jax.random.uniform(
        kk, shape, jnp.float32, -bound, bound)
    return {
        "w_ih": u(ks[0], (4 * H, D), k),   # PyTorch weight_ih_l0
        "w_hh": u(ks[1], (4 * H, H), k),   # PyTorch weight_hh_l0
        "b_ih": u(ks[2], (4 * H,), k),
        "b_hh": u(ks[3], (4 * H,), k),
        "w_fc": u(ks[4], (1, H), k),       # PyTorch fc.weight
        "b_fc": u(ks[5], (1,), k),         # PyTorch fc.bias
    }


def _prepare_inputs(x, params):
    """One-time (per compile) layout glue: fuse, pre-scale, pad, cast."""
    B, T, D = x.shape
    H = params["w_hh"].shape[1]
    HP = _round_up(H, 128)            # each gate padded to a 128-lane block
    DP = _round_up(D + 1, 128)        # features + ones/bias column, lane-padded
    BB = min(256, _round_up(B, 8))    # batch rows per kernel instance
    BPT = _round_up(B, BB)            # total padded batch (multiple of BB)
    NB = BPT // BB

    # Pre-scale for the tanh-form sigmoid: i, f, o by 0.5, g unchanged.
    scale = (0.5, 0.5, 1.0, 0.5)

    def gate_cols(w, g):              # (4H, K) -> (K, HP), zero-padded columns
        return jnp.pad(w[g * H:(g + 1) * H, :].T, ((0, 0), (0, HP - H)))

    w_ih, w_hh = params["w_ih"], params["w_hh"]
    b_all = params["b_ih"] + params["b_hh"]

    wx_core = jnp.concatenate(
        [scale[g] * gate_cols(w_ih, g) for g in range(4)], axis=1)        # (D, 4HP)
    b_row = jnp.concatenate(
        [scale[g] * jnp.pad(b_all[g * H:(g + 1) * H], (0, HP - H))
         for g in range(4)])                                              # (4HP,)
    wx = (jnp.zeros((DP, 4 * HP), jnp.float32)
          .at[:D, :].set(wx_core)
          .at[D, :].set(b_row)                                            # bias row
          .astype(jnp.bfloat16))                                          # (DP, 4HP)

    wh_core = jnp.concatenate(
        [scale[g] * gate_cols(w_hh, g) for g in range(4)], axis=1)        # (H, 4HP)
    wh = jnp.pad(wh_core, ((0, HP - H), (0, 0))).astype(jnp.bfloat16)     # (HP, 4HP)

    wfc = jnp.pad(params["w_fc"].reshape(1, H),
                  ((0, 0), (0, HP - H))).astype(jnp.float32)              # (1, HP)
    bfc = params["b_fc"].reshape(1, 1).astype(jnp.float32)                # (1, 1)

    # time-major, batch padded to NB*BB, ones column appended, lane-padded
    x_tm = jnp.transpose(x, (1, 0, 2))                                    # (T, B, D)
    x_tm = jnp.pad(x_tm, ((0, 0), (0, BPT - B), (0, 0)))                  # (T, BPT, D)
    ones = jnp.ones((T, BPT, 1), x.dtype)
    x_aug = jnp.concatenate([x_tm, ones], axis=-1)                        # (T, BPT, D+1)
    x_aug = jnp.pad(x_aug, ((0, 0), (0, 0), (0, DP - (D + 1))))           # (T, BPT, DP)
    x_blocks = (x_aug.reshape(T, NB, BB, DP)
                .transpose(1, 0, 2, 3)
                .reshape(NB, T * BB, DP)
                .astype(jnp.bfloat16))                                    # (NB, T*BB, DP)
    return x_blocks, wx, wh, wfc, bfc, (NB, BB, HP, DP, T)


@jax.jit
def lstm_forward(x, params):
    """x: (B, T, D) batch_first, float32. Returns (B,) like out.view(-1)."""
    B = x.shape[0]
    x_blocks, wx, wh, wfc, bfc, (NB, BB, HP, DP, T) = _prepare_inputs(x, params)

    out = pl.pallas_call(
        _lstm_fc_kernel,
        out_shape=jax.ShapeDtypeStruct((NB, BB, 128), jnp.float32),
        grid=(NB,),
        in_specs=[
            pl.BlockSpec((1, T * BB, DP), lambda b: (b, 0, 0)),   # x block
            pl.BlockSpec((DP, 4 * HP), lambda b: (0, 0)),         # wx (shared)
            pl.BlockSpec((HP, 4 * HP), lambda b: (0, 0)),         # wh (shared)
            pl.BlockSpec((1, HP), lambda b: (0, 0)),              # wfc
            pl.BlockSpec((1, 1), lambda b: (0, 0)),               # bfc
        ],
        out_specs=pl.BlockSpec((1, BB, 128), lambda b: (b, 0, 0)),
        scratch_shapes=[pltpu.VMEM((T * BB, 4 * HP), jnp.float32)],
        compiler_params=pltpu.CompilerParams(
            dimension_semantics=("parallel",)),
    )(x_blocks, wx, wh, wfc, bfc)
    return out.reshape(NB * BB, 128)[:B, 0]


def lstm_forward_ref(x, params):
    """Pure-JAX f32 reference (same math as PyTorch nn.LSTM + Linear)."""
    B, T, D = x.shape
    H = params["w_hh"].shape[1]
    w_ih, w_hh = params["w_ih"], params["w_hh"]
    b = params["b_ih"] + params["b_hh"]
    h = jnp.zeros((B, H), jnp.float32)
    c = jnp.zeros((B, H), jnp.float32)
    for t in range(T):
        gates = x[:, t, :] @ w_ih.T + h @ w_hh.T + b
        i = jax.nn.sigmoid(gates[:, 0:H])
        f = jax.nn.sigmoid(gates[:, H:2 * H])
        g = jnp.tanh(gates[:, 2 * H:3 * H])
        o = jax.nn.sigmoid(gates[:, 3 * H:4 * H])
        c = f * c + i * g
        h = o * jnp.tanh(c)
    return (h @ params["w_fc"].T + params["b_fc"]).reshape(-1)


if __name__ == "__main__":
    # Shapes consistent with the module: extract_features -> 14 features per
    # window (input_size=14); hidden_size=50; short synthetic sequence.
    batch, seq_len, input_size, hidden_size = 2, 8, 14, 50

    key = jax.random.PRNGKey(0)
    k_x, k_p = jax.random.split(key)
    x = jax.random.normal(k_x, (batch, seq_len, input_size), jnp.float32)
    params = init_params(k_p, input_size, hidden_size)

    out = jax.block_until_ready(lstm_forward(x, params))
    ref = jax.block_until_ready(lstm_forward_ref(x, params))

    assert out.shape == (batch,)
    # bf16 MXU operands / bf16 recurrent h (f32 accumulation & gate math) ->
    # relaxed tolerance vs. the pure-f32 reference.
    assert jnp.allclose(out, ref, atol=5e-2, rtol=5e-2), (out, ref)
    print("KERNEL_OK")
</pallas_src>

<mosaic_0001>
module attributes {stable_mosaic.version = 11 : i64} {
  func.func @_lstm_fc_kernel(%arg0: i32, %arg1: memref<1x64x128xbf16, #tpu.memory_space<vmem>>, %arg2: memref<128x512xbf16, #tpu.memory_space<vmem>>, %arg3: memref<128x512xbf16, #tpu.memory_space<vmem>>, %arg4: memref<1x128xf32, #tpu.memory_space<vmem>>, %arg5: memref<1x1xf32, #tpu.memory_space<vmem>>, %arg6: memref<1x8x128xf32, #tpu.memory_space<vmem>>, %arg7: memref<64x512xf32, #tpu.memory_space<vmem>>) attributes {dimension_semantics = [#tpu.dimension_semantics<parallel>], iteration_bounds = array<i64: 1>, scalar_prefetch = 0 : i64, scratch_operands = 1 : i64, tpu.core_type = #tpu.core_type<tc>, window_params = [{transform_indices = @transform_0, window_bounds = array<i64: 1, 64, 128>}, {pipeline_mode = #tpu.pipeline_mode<synchronous>, transform_indices = @transform_1, window_bounds = array<i64: 128, 512>}, {pipeline_mode = #tpu.pipeline_mode<synchronous>, transform_indices = @transform_2, window_bounds = array<i64: 128, 512>}, {pipeline_mode = #tpu.pipeline_mode<synchronous>, transform_indices = @transform_3, window_bounds = array<i64: 1, 128>}, {pipeline_mode = #tpu.pipeline_mode<synchronous>, transform_indices = @transform_4, window_bounds = array<i64: 1, 1>}, {transform_indices = @transform_5, window_bounds = array<i64: 1, 8, 128>}]} {
    %c0 = arith.constant 0 : index
    %c0_0 = arith.constant 0 : index
    %c0_1 = arith.constant 0 : index
    %0 = vector.load %arg1[%c0, %c0_0, %c0_1] : memref<1x64x128xbf16, #tpu.memory_space<vmem>>, vector<1x64x128xbf16>
    %1 = vector.shape_cast %0 : vector<1x64x128xbf16> to vector<64x128xbf16>
    %c0_2 = arith.constant 0 : index
    %c0_3 = arith.constant 0 : index
    %2 = vector.load %arg2[%c0_2, %c0_3] : memref<128x512xbf16, #tpu.memory_space<vmem>>, vector<128x512xbf16>
    %cst = arith.constant dense<0.000000e+00> : vector<64x512xf32>
    %3 = tpu.matmul %1, %2, %cst {dimension_numbers = #tpu.dot_dimension_numbers<[1], [0], [0], [1], [0, 0, 1, 1], [], []>} : vector<64x128xbf16>, vector<128x512xbf16>, vector<64x512xf32> -> vector<64x512xf32>
    %c0_4 = arith.constant 0 : index
    %c0_5 = arith.constant 0 : index
    %4 = vector.load %arg7[%c0_4, %c0_5] : memref<64x512xf32, #tpu.memory_space<vmem>>, vector<64x512xf32>
    tpu.vector_store %arg7[%c0_4, %c0_5], %3 {strides = array<i32>} : memref<64x512xf32, #tpu.memory_space<vmem>>, vector<64x512xf32>,
    %c0_6 = arith.constant 0 : index
    %c0_7 = arith.constant 0 : index
    %5 = vector.load %arg3[%c0_6, %c0_7] : memref<128x512xbf16, #tpu.memory_space<vmem>>, vector<128x512xbf16>
    %cst_8 = arith.constant 0.000000e+00 : f32
    %6 = vector.broadcast %cst_8 : f32 to vector<8x128xf32>
    %c0_9 = arith.constant 0 : index
    %c0_10 = arith.constant 0 : index
    %7 = vector.load %arg7[%c0_9, %c0_10] : memref<64x512xf32, #tpu.memory_space<vmem>>, vector<8x512xf32>
    %8 = vector.extract_strided_slice %7 {offsets = [0, 0], sizes = [8, 128], strides = [1, 1]} : vector<8x512xf32> to vector<8x128xf32>
    %9 = math.tanh %8 : vector<8x128xf32>
    %cst_11 = arith.constant 5.000000e-01 : f32
    %10 = vector.broadcast %cst_11 : f32 to vector<8x128xf32>
    %11 = arith.mulf %10, %9 : vector<8x128xf32>
    %cst_12 = arith.constant 5.000000e-01 : f32
    %12 = vector.broadcast %cst_12 : f32 to vector<8x128xf32>
    %13 = arith.addf %11, %12 : vector<8x128xf32>
    %14 = vector.extract_strided_slice %7 {offsets = [0, 128], sizes = [8, 128], strides = [1, 1]} : vector<8x512xf32> to vector<8x128xf32>
    %15 = math.tanh %14 : vector<8x128xf32>
    %cst_13 = arith.constant 5.000000e-01 : f32
    %16 = vector.broadcast %cst_13 : f32 to vector<8x128xf32>
    %17 = arith.mulf %16, %15 : vector<8x128xf32>
    %cst_14 = arith.constant 5.000000e-01 : f32
    %18 = vector.broadcast %cst_14 : f32 to vector<8x128xf32>
    %19 = arith.addf %17, %18 : vector<8x128xf32>
    %20 = vector.extract_strided_slice %7 {offsets = [0, 256], sizes = [8, 128], strides = [1, 1]} : vector<8x512xf32> to vector<8x128xf32>
    %21 = math.tanh %20 : vector<8x128xf32>
    %22 = vector.extract_strided_slice %7 {offsets = [0, 384], sizes = [8, 128], strides = [1, 1]} : vector<8x512xf32> to vector<8x128xf32>
    %23 = math.tanh %22 : vector<8x128xf32>
    %cst_15 = arith.constant 5.000000e-01 : f32
    %24 = vector.broadcast %cst_15 : f32 to vector<8x128xf32>
    %25 = arith.mulf %24, %23 : vector<8x128xf32>
    %cst_16 = arith.constant 5.000000e-01 : f32
    %26 = vector.broadcast %cst_16 : f32 to vector<8x128xf32>
    %27 = arith.addf %25, %26 : vector<8x128xf32>
    %28 = arith.mulf %19, %6 : vector<8x128xf32>
    %29 = arith.mulf %13, %21 : vector<8x128xf32>
    %30 = arith.addf %28, %29 : vector<8x128xf32>
    %31 = math.tanh %30 : vector<8x128xf32>
    %32 = arith.mulf %27, %31 : vector<8x128xf32>
    %33 = arith.truncf %32 : vector<8x128xf32> to vector<8x128xbf16>
    %c8 = arith.constant 8 : index
    %c0_17 = arith.constant 0 : index
    %34 = vector.load %arg7[%c8, %c0_17] : memref<64x512xf32, #tpu.memory_space<vmem>>, vector<8x512xf32>
    %cst_18 = arith.constant dense<0.000000e+00> : vector<8x512xf32>
    %35 = tpu.matmul %33, %5, %cst_18 {dimension_numbers = #tpu.dot_dimension_numbers<[1], [0], [0], [1], [0, 0, 1, 1], [], []>} : vector<8x128xbf16>, vector<128x512xbf16>, vector<8x512xf32> -> vector<8x512xf32>
    %36 = arith.addf %34, %35 : vector<8x512xf32>
    %37 = vector.extract_strided_slice %36 {offsets = [0, 0], sizes = [8, 128], strides = [1, 1]} : vector<8x512xf32> to vector<8x128xf32>
    %38 = math.tanh %37 : vector<8x128xf32>
    %cst_19 = arith.constant 5.000000e-01 : f32
    %39 = vector.broadcast %cst_19 : f32 to vector<8x128xf32>
    %40 = arith.mulf %39, %38 : vector<8x128xf32>
    %cst_20 = arith.constant 5.000000e-01 : f32
    %41 = vector.broadcast %cst_20 : f32 to vector<8x128xf32>
    %42 = arith.addf %40, %41 : vector<8x128xf32>
    %43 = vector.extract_strided_slice %36 {offsets = [0, 128], sizes = [8, 128], strides = [1, 1]} : vector<8x512xf32> to vector<8x128xf32>
    %44 = math.tanh %43 : vector<8x128xf32>
    %cst_21 = arith.constant 5.000000e-01 : f32
    %45 = vector.broadcast %cst_21 : f32 to vector<8x128xf32>
    %46 = arith.mulf %45, %44 : vector<8x128xf32>
    %cst_22 = arith.constant 5.000000e-01 : f32
    %47 = vector.broadcast %cst_22 : f32 to vector<8x128xf32>
    %48 = arith.addf %46, %47 : vector<8x128xf32>
    %49 = vector.extract_strided_slice %36 {offsets = [0, 256], sizes = [8, 128], strides = [1, 1]} : vector<8x512xf32> to vector<8x128xf32>
    %50 = math.tanh %49 : vector<8x128xf32>
    %51 = vector.extract_strided_slice %36 {offsets = [0, 384], sizes = [8, 128], strides = [1, 1]} : vector<8x512xf32> to vector<8x128xf32>
    %52 = math.tanh %51 : vector<8x128xf32>
    %cst_23 = arith.constant 5.000000e-01 : f32
    %53 = vector.broadcast %cst_23 : f32 to vector<8x128xf32>
    %54 = arith.mulf %53, %52 : vector<8x128xf32>
    %cst_24 = arith.constant 5.000000e-01 : f32
    %55 = vector.broadcast %cst_24 : f32 to vector<8x128xf32>
    %56 = arith.addf %54, %55 : vector<8x128xf32>
    %57 = arith.mulf %48, %30 : vector<8x128xf32>
    %58 = arith.mulf %42, %50 : vector<8x128xf32>
    %59 = arith.addf %57, %58 : vector<8x128xf32>
    %60 = math.tanh %59 : vector<8x128xf32>
    %61 = arith.mulf %56, %60 : vector<8x128xf32>
    %62 = arith.truncf %61 : vector<8x128xf32> to vector<8x128xbf16>
    %c16 = arith.constant 16 : index
    %c0_25 = arith.constant 0 : index
    %63 = vector.load %arg7[%c16, %c0_25] : memref<64x512xf32, #tpu.memory_space<vmem>>, vector<8x512xf32>
    %cst_26 = arith.constant dense<0.000000e+00> : vector<8x512xf32>
    %64 = tpu.matmul %62, %5, %cst_26 {dimension_numbers = #tpu.dot_dimension_numbers<[1], [0], [0], [1], [0, 0, 1, 1], [], []>} : vector<8x128xbf16>, vector<128x512xbf16>, vector<8x512xf32> -> vector<8x512xf32>
    %65 = arith.addf %63, %64 : vector<8x512xf32>
    %66 = vector.extract_strided_slice %65 {offsets = [0, 0], sizes = [8, 128], strides = [1, 1]} : vector<8x512xf32> to vector<8x128xf32>
    %67 = math.tanh %66 : vector<8x128xf32>
    %cst_27 = arith.constant 5.000000e-01 : f32
    %68 = vector.broadcast %cst_27 : f32 to vector<8x128xf32>
    %69 = arith.mulf %68, %67 : vector<8x128xf32>
    %cst_28 = arith.constant 5.000000e-01 : f32
    %70 = vector.broadcast %cst_28 : f32 to vector<8x128xf32>
    %71 = arith.addf %69, %70 : vector<8x128xf32>
    %72 = vector.extract_strided_slice %65 {offsets = [0, 128], sizes = [8, 128], strides = [1, 1]} : vector<8x512xf32> to vector<8x128xf32>
    %73 = math.tanh %72 : vector<8x128xf32>
    %cst_29 = arith.constant 5.000000e-01 : f32
    %74 = vector.broadcast %cst_29 : f32 to vector<8x128xf32>
    %75 = arith.mulf %74, %73 : vector<8x128xf32>
    %cst_30 = arith.constant 5.000000e-01 : f32
    %76 = vector.broadcast %cst_30 : f32 to vector<8x128xf32>
    %77 = arith.addf %75, %76 : vector<8x128xf32>
    %78 = vector.extract_strided_slice %65 {offsets = [0, 256], sizes = [8, 128], strides = [1, 1]} : vector<8x512xf32> to vector<8x128xf32>
    %79 = math.tanh %78 : vector<8x128xf32>
    %80 = vector.extract_strided_slice %65 {offsets = [0, 384], sizes = [8, 128], strides = [1, 1]} : vector<8x512xf32> to vector<8x128xf32>
    %81 = math.tanh %80 : vector<8x128xf32>
    %cst_31 = arith.constant 5.000000e-01 : f32
    %82 = vector.broadcast %cst_31 : f32 to vector<8x128xf32>
    %83 = arith.mulf %82, %81 : vector<8x128xf32>
    %cst_32 = arith.constant 5.000000e-01 : f32
    %84 = vector.broadcast %cst_32 : f32 to vector<8x128xf32>
    %85 = arith.addf %83, %84 : vector<8x128xf32>
    %86 = arith.mulf %77, %59 : vector<8x128xf32>
    %87 = arith.mulf %71, %79 : vector<8x128xf32>
    %88 = arith.addf %86, %87 : vector<8x128xf32>
    %89 = math.tanh %88 : vector<8x128xf32>
    %90 = arith.mulf %85, %89 : vector<8x128xf32>
    %91 = arith.truncf %90 : vector<8x128xf32> to vector<8x128xbf16>
    %c24 = arith.constant 24 : index
    %c0_33 = arith.constant 0 : index
    %92 = vector.load %arg7[%c24, %c0_33] : memref<64x512xf32, #tpu.memory_space<vmem>>, vector<8x512xf32>
    %cst_34 = arith.constant dense<0.000000e+00> : vector<8x512xf32>
    %93 = tpu.matmul %91, %5, %cst_34 {dimension_numbers = #tpu.dot_dimension_numbers<[1], [0], [0], [1], [0, 0, 1, 1], [], []>} : vector<8x128xbf16>, vector<128x512xbf16>, vector<8x512xf32> -> vector<8x512xf32>
    %94 = arith.addf %92, %93 : vector<8x512xf32>
    %95 = vector.extract_strided_slice %94 {offsets = [0, 0], sizes = [8, 128], strides = [1, 1]} : vector<8x512xf32> to vector<8x128xf32>
    %96 = math.tanh %95 : vector<8x128xf32>
    %cst_35 = arith.constant 5.000000e-01 : f32
    %97 = vector.broadcast %cst_35 : f32 to vector<8x128xf32>
    %98 = arith.mulf %97, %96 : vector<8x128xf32>
    %cst_36 = arith.constant 5.000000e-01 : f32
    %99 = vector.broadcast %cst_36 : f32 to vector<8x128xf32>
    %100 = arith.addf %98, %99 : vector<8x128xf32>
    %101 = vector.extract_strided_slice %94 {offsets = [0, 128], sizes = [8, 128], strides = [1, 1]} : vector<8x512xf32> to vector<8x128xf32>
    %102 = math.tanh %101 : vector<8x128xf32>
    %cst_37 = arith.constant 5.000000e-01 : f32
    %103 = vector.broadcast %cst_37 : f32 to vector<8x128xf32>
    %104 = arith.mulf %103, %102 : vector<8x128xf32>
    %cst_38 = arith.constant 5.000000e-01 : f32
    %105 = vector.broadcast %cst_38 : f32 to vector<8x128xf32>
    %106 = arith.addf %104, %105 : vector<8x128xf32>
    %107 = vector.extract_strided_slice %94 {offsets = [0, 256], sizes = [8, 128], strides = [1, 1]} : vector<8x512xf32> to vector<8x128xf32>
    %108 = math.tanh %107 : vector<8x128xf32>
    %109 = vector.extract_strided_slice %94 {offsets = [0, 384], sizes = [8, 128], strides = [1, 1]} : vector<8x512xf32> to vector<8x128xf32>
    %110 = math.tanh %109 : vector<8x128xf32>
    %cst_39 = arith.constant 5.000000e-01 : f32
    %111 = vector.broadcast %cst_39 : f32 to vector<8x128xf32>
    %112 = arith.mulf %111, %110 : vector<8x128xf32>
    %cst_40 = arith.constant 5.000000e-01 : f32
    %113 = vector.broadcast %cst_40 : f32 to vector<8x128xf32>
    %114 = arith.addf %112, %113 : vector<8x128xf32>
    %115 = arith.mulf %106, %88 : vector<8x128xf32>
    %116 = arith.mulf %100, %108 : vector<8x128xf32>
    %117 = arith.addf %115, %116 : vector<8x128xf32>
    %118 = math.tanh %117 : vector<8x128xf32>
    %119 = arith.mulf %114, %118 : vector<8x128xf32>
    %120 = arith.truncf %119 : vector<8x128xf32> to vector<8x128xbf16>
    %c32 = arith.constant 32 : index
    %c0_41 = arith.constant 0 : index
    %121 = vector.load %arg7[%c32, %c0_41] : memref<64x512xf32, #tpu.memory_space<vmem>>, vector<8x512xf32>
    %cst_42 = arith.constant dense<0.000000e+00> : vector<8x512xf32>
    %122 = tpu.matmul %120, %5, %cst_42 {dimension_numbers = #tpu.dot_dimension_numbers<[1], [0], [0], [1], [0, 0, 1, 1], [], []>} : vector<8x128xbf16>, vector<128x512xbf16>, vector<8x512xf32> -> vector<8x512xf32>
    %123 = arith.addf %121, %122 : vector<8x512xf32>
    %124 = vector.extract_strided_slice %123 {offsets = [0, 0], sizes = [8, 128], strides = [1, 1]} : vector<8x512xf32> to vector<8x128xf32>
    %125 = math.tanh %124 : vector<8x128xf32>
    %cst_43 = arith.constant 5.000000e-01 : f32
    %126 = vector.broadcast %cst_43 : f32 to vector<8x128xf32>
    %127 = arith.mulf %126, %125 : vector<8x128xf32>
    %cst_44 = arith.constant 5.000000e-01 : f32
    %128 = vector.broadcast %cst_44 : f32 to vector<8x128xf32>
    %129 = arith.addf %127, %128 : vector<8x128xf32>
    %130 = vector.extract_strided_slice %123 {offsets = [0, 128], sizes = [8, 128], strides = [1, 1]} : vector<8x512xf32> to vector<8x128xf32>
    %131 = math.tanh %130 : vector<8x128xf32>
    %cst_45 = arith.constant 5.000000e-01 : f32
    %132 = vector.broadcast %cst_45 : f32 to vector<8x128xf32>
    %133 = arith.mulf %132, %131 : vector<8x128xf32>
    %cst_46 = arith.constant 5.000000e-01 : f32
    %134 = vector.broadcast %cst_46 : f32 to vector<8x128xf32>
    %135 = arith.addf %133, %134 : vector<8x128xf32>
    %136 = vector.extract_strided_slice %123 {offsets = [0, 256], sizes = [8, 128], strides = [1, 1]} : vector<8x512xf32> to vector<8x128xf32>
    %137 = math.tanh %136 : vector<8x128xf32>
    %138 = vector.extract_strided_slice %123 {offsets = [0, 384], sizes = [8, 128], strides = [1, 1]} : vector<8x512xf32> to vector<8x128xf32>
    %139 = math.tanh %138 : vector<8x128xf32>
    %cst_47 = arith.constant 5.000000e-01 : f32
    %140 = vector.broadcast %cst_47 : f32 to vector<8x128xf32>
    %141 = arith.mulf %140, %139 : vector<8x128xf32>
    %cst_48 = arith.constant 5.000000e-01 : f32
    %142 = vector.broadcast %cst_48 : f32 to vector<8x128xf32>
    %143 = arith.addf %141, %142 : vector<8x128xf32>
    %144 = arith.mulf %135, %117 : vector<8x128xf32>
    %145 = arith.mulf %129, %137 : vector<8x128xf32>
    %146 = arith.addf %144, %145 : vector<8x128xf32>
    %147 = math.tanh %146 : vector<8x128xf32>
    %148 = arith.mulf %143, %147 : vector<8x128xf32>
    %149 = arith.truncf %148 : vector<8x128xf32> to vector<8x128xbf16>
    %c40 = arith.constant 40 : index
    %c0_49 = arith.constant 0 : index
    %150 = vector.load %arg7[%c40, %c0_49] : memref<64x512xf32, #tpu.memory_space<vmem>>, vector<8x512xf32>
    %cst_50 = arith.constant dense<0.000000e+00> : vector<8x512xf32>
    %151 = tpu.matmul %149, %5, %cst_50 {dimension_numbers = #tpu.dot_dimension_numbers<[1], [0], [0], [1], [0, 0, 1, 1], [], []>} : vector<8x128xbf16>, vector<128x512xbf16>, vector<8x512xf32> -> vector<8x512xf32>
    %152 = arith.addf %150, %151 : vector<8x512xf32>
    %153 = vector.extract_strided_slice %152 {offsets = [0, 0], sizes = [8, 128], strides = [1, 1]} : vector<8x512xf32> to vector<8x128xf32>
    %154 = math.tanh %153 : vector<8x128xf32>
    %cst_51 = arith.constant 5.000000e-01 : f32
    %155 = vector.broadcast %cst_51 : f32 to vector<8x128xf32>
    %156 = arith.mulf %155, %154 : vector<8x128xf32>
    %cst_52 = arith.constant 5.000000e-01 : f32
    %157 = vector.broadcast %cst_52 : f32 to vector<8x128xf32>
    %158 = arith.addf %156, %157 : vector<8x128xf32>
    %159 = vector.extract_strided_slice %152 {offsets = [0, 128], sizes = [8, 128], strides = [1, 1]} : vector<8x512xf32> to vector<8x128xf32>
    %160 = math.tanh %159 : vector<8x128xf32>
    %cst_53 = arith.constant 5.000000e-01 : f32
    %161 = vector.broadcast %cst_53 : f32 to vector<8x128xf32>
    %162 = arith.mulf %161, %160 : vector<8x128xf32>
    %cst_54 = arith.constant 5.000000e-01 : f32
    %163 = vector.broadcast %cst_54 : f32 to vector<8x128xf32>
    %164 = arith.addf %162, %163 : vector<8x128xf32>
    %165 = vector.extract_strided_slice %152 {offsets = [0, 256], sizes = [8, 128], strides = [1, 1]} : vector<8x512xf32> to vector<8x128xf32>
    %166 = math.tanh %165 : vector<8x128xf32>
    %167 = vector.extract_strided_slice %152 {offsets = [0, 384], sizes = [8, 128], strides = [1, 1]} : vector<8x512xf32> to vector<8x128xf32>
    %168 = math.tanh %167 : vector<8x128xf32>
    %cst_55 = arith.constant 5.000000e-01 : f32
    %169 = vector.broadcast %cst_55 : f32 to vector<8x128xf32>
    %170 = arith.mulf %169, %168 : vector<8x128xf32>
    %cst_56 = arith.constant 5.000000e-01 : f32
    %171 = vector.broadcast %cst_56 : f32 to vector<8x128xf32>
    %172 = arith.addf %170, %171 : vector<8x128xf32>
    %173 = arith.mulf %164, %146 : vector<8x128xf32>
    %174 = arith.mulf %158, %166 : vector<8x128xf32>
    %175 = arith.addf %173, %174 : vector<8x128xf32>
    %176 = math.tanh %175 : vector<8x128xf32>
    %177 = arith.mulf %172, %176 : vector<8x128xf32>
    %178 = arith.truncf %177 : vector<8x128xf32> to vector<8x128xbf16>
    %c48 = arith.constant 48 : index
    %c0_57 = arith.constant 0 : index
    %179 = vector.load %arg7[%c48, %c0_57] : memref<64x512xf32, #tpu.memory_space<vmem>>, vector<8x512xf32>
    %cst_58 = arith.constant dense<0.000000e+00> : vector<8x512xf32>
    %180 = tpu.matmul %178, %5, %cst_58 {dimension_numbers = #tpu.dot_dimension_numbers<[1], [0], [0], [1], [0, 0, 1, 1], [], []>} : vector<8x128xbf16>, vector<128x512xbf16>, vector<8x512xf32> -> vector<8x512xf32>
    %181 = arith.addf %179, %180 : vector<8x512xf32>
    %182 = vector.extract_strided_slice %181 {offsets = [0, 0], sizes = [8, 128], strides = [1, 1]} : vector<8x512xf32> to vector<8x128xf32>
    %183 = math.tanh %182 : vector<8x128xf32>
    %cst_59 = arith.constant 5.000000e-01 : f32
    %184 = vector.broadcast %cst_59 : f32 to vector<8x128xf32>
    %185 = arith.mulf %184, %183 : vector<8x128xf32>
    %cst_60 = arith.constant 5.000000e-01 : f32
    %186 = vector.broadcast %cst_60 : f32 to vector<8x128xf32>
    %187 = arith.addf %185, %186 : vector<8x128xf32>
    %188 = vector.extract_strided_slice %181 {offsets = [0, 128], sizes = [8, 128], strides = [1, 1]} : vector<8x512xf32> to vector<8x128xf32>
    %189 = math.tanh %188 : vector<8x128xf32>
    %cst_61 = arith.constant 5.000000e-01 : f32
    %190 = vector.broadcast %cst_61 : f32 to vector<8x128xf32>
    %191 = arith.mulf %190, %189 : vector<8x128xf32>
    %cst_62 = arith.constant 5.000000e-01 : f32
    %192 = vector.broadcast %cst_62 : f32 to vector<8x128xf32>
    %193 = arith.addf %191, %192 : vector<8x128xf32>
    %194 = vector.extract_strided_slice %181 {offsets = [0, 256], sizes = [8, 128], strides = [1, 1]} : vector<8x512xf32> to vector<8x128xf32>
    %195 = math.tanh %194 : vector<8x128xf32>
    %196 = vector.extract_strided_slice %181 {offsets = [0, 384], sizes = [8, 128], strides = [1, 1]} : vector<8x512xf32> to vector<8x128xf32>
    %197 = math.tanh %196 : vector<8x128xf32>
    %cst_63 = arith.constant 5.000000e-01 : f32
    %198 = vector.broadcast %cst_63 : f32 to vector<8x128xf32>
    %199 = arith.mulf %198, %197 : vector<8x128xf32>
    %cst_64 = arith.constant 5.000000e-01 : f32
    %200 = vector.broadcast %cst_64 : f32 to vector<8x128xf32>
    %201 = arith.addf %199, %200 : vector<8x128xf32>
    %202 = arith.mulf %193, %175 : vector<8x128xf32>
    %203 = arith.mulf %187, %195 : vector<8x128xf32>
    %204 = arith.addf %202, %203 : vector<8x128xf32>
    %205 = math.tanh %204 : vector<8x128xf32>
    %206 = arith.mulf %201, %205 : vector<8x128xf32>
    %207 = arith.truncf %206 : vector<8x128xf32> to vector<8x128xbf16>
    %c56 = arith.constant 56 : index
    %c0_65 = arith.constant 0 : index
    %208 = vector.load %arg7[%c56, %c0_65] : memref<64x512xf32, #tpu.memory_space<vmem>>, vector<8x512xf32>
    %cst_66 = arith.constant dense<0.000000e+00> : vector<8x512xf32>
    %209 = tpu.matmul %207, %5, %cst_66 {dimension_numbers = #tpu.dot_dimension_numbers<[1], [0], [0], [1], [0, 0, 1, 1], [], []>} : vector<8x128xbf16>, vector<128x512xbf16>, vector<8x512xf32> -> vector<8x512xf32>
    %210 = arith.addf %208, %209 : vector<8x512xf32>
    %211 = vector.extract_strided_slice %210 {offsets = [0, 0], sizes = [8, 128], strides = [1, 1]} : vector<8x512xf32> to vector<8x128xf32>
    %212 = math.tanh %211 : vector<8x128xf32>
    %cst_67 = arith.constant 5.000000e-01 : f32
    %213 = vector.broadcast %cst_67 : f32 to vector<8x128xf32>
    %214 = arith.mulf %213, %212 : vector<8x128xf32>
    %cst_68 = arith.constant 5.000000e-01 : f32
    %215 = vector.broadcast %cst_68 : f32 to vector<8x128xf32>
    %216 = arith.addf %214, %215 : vector<8x128xf32>
    %217 = vector.extract_strided_slice %210 {offsets = [0, 128], sizes = [8, 128], strides = [1, 1]} : vector<8x512xf32> to vector<8x128xf32>
    %218 = math.tanh %217 : vector<8x128xf32>
    %cst_69 = arith.constant 5.000000e-01 : f32
    %219 = vector.broadcast %cst_69 : f32 to vector<8x128xf32>
    %220 = arith.mulf %219, %218 : vector<8x128xf32>
    %cst_70 = arith.constant 5.000000e-01 : f32
    %221 = vector.broadcast %cst_70 : f32 to vector<8x128xf32>
    %222 = arith.addf %220, %221 : vector<8x128xf32>
    %223 = vector.extract_strided_slice %210 {offsets = [0, 256], sizes = [8, 128], strides = [1, 1]} : vector<8x512xf32> to vector<8x128xf32>
    %224 = math.tanh %223 : vector<8x128xf32>
    %225 = vector.extract_strided_slice %210 {offsets = [0, 384], sizes = [8, 128], strides = [1, 1]} : vector<8x512xf32> to vector<8x128xf32>
    %226 = math.tanh %225 : vector<8x128xf32>
    %cst_71 = arith.constant 5.000000e-01 : f32
    %227 = vector.broadcast %cst_71 : f32 to vector<8x128xf32>
    %228 = arith.mulf %227, %226 : vector<8x128xf32>
    %cst_72 = arith.constant 5.000000e-01 : f32
    %229 = vector.broadcast %cst_72 : f32 to vector<8x128xf32>
    %230 = arith.addf %228, %229 : vector<8x128xf32>
    %231 = arith.mulf %222, %204 : vector<8x128xf32>
    %232 = arith.mulf %216, %224 : vector<8x128xf32>
    %233 = arith.addf %231, %232 : vector<8x128xf32>
    %234 = math.tanh %233 : vector<8x128xf32>
    %235 = arith.mulf %230, %234 : vector<8x128xf32>
    %236 = arith.truncf %235 : vector<8x128xf32> to vector<8x128xbf16>
    %237 = arith.extf %236 : vector<8x128xbf16> to vector<8x128xf32>
    %c0_73 = arith.constant 0 : index
    %c0_74 = arith.constant 0 : index
    %238 = vector.load %arg4[%c0_73, %c0_74] : memref<1x128xf32, #tpu.memory_space<vmem>>, vector<1x128xf32>
    %239 = vector.broadcast %238 : vector<1x128xf32> to vector<8x128xf32>
    %240 = arith.mulf %237, %239 : vector<8x128xf32>
    %cst_75 = arith.constant dense<0.000000e+00> : vector<8xf32>
    %241 = vector.multi_reduction <add>, %240, %cst_75 [1] : vector<8x128xf32> to vector<8xf32>
    %242 = vector.shape_cast %241 : vector<8xf32> to vector<8x1xf32>
    %c0_76 = arith.constant 0 : index
    %c0_77 = arith.constant 0 : index
    %243 = vector.load %arg5[%c0_76, %c0_77] : memref<1x1xf32, #tpu.memory_space<vmem>>, vector<1x1xf32>
    %244 = vector.broadcast %243 : vector<1x1xf32> to vector<8x1xf32>
    %245 = arith.addf %242, %244 : vector<8x1xf32>
    %246 = vector.shape_cast %245 : vector<8x1xf32> to vector<8x1xf32>
    %247 = vector.broadcast %246 : vector<8x1xf32> to vector<8x128xf32>
    %c0_78 = arith.constant 0 : index
    %c0_79 = arith.constant 0 : index
    %c0_80 = arith.constant 0 : index
    %248 = vector.load %arg6[%c0_78, %c0_79, %c0_80] : memref<1x8x128xf32, #tpu.memory_space<vmem>>, vector<1x8x128xf32>
    %249 = vector.shape_cast %248 : vector<1x8x128xf32> to vector<8x128xf32>
    %250 = vector.shape_cast %247 : vector<8x128xf32> to vector<1x8x128xf32>
    tpu.vector_store %arg6[%c0_78, %c0_79, %c0_80], %250 {strides = array<i32>} : memref<1x8x128xf32, #tpu.memory_space<vmem>>, vector<1x8x128xf32>,
    return
  }
  func.func @transform_0(%arg0: i32) -> (i32, i32, i32) {
    %c0_i32 = arith.constant 0 : i32
    %c0_i32_0 = arith.constant 0 : i32
    %c0_i32_1 = arith.constant 0 : i32
    return %arg0, %c0_i32, %c0_i32_0 : i32, i32, i32
  }
  func.func @transform_1(%arg0: i32) -> (i32, i32) {
    %c0_i32 = arith.constant 0 : i32
    %c0_i32_0 = arith.constant 0 : i32
    %c0_i32_1 = arith.constant 0 : i32
    return %c0_i32, %c0_i32_0 : i32, i32
  }
  func.func @transform_2(%arg0: i32) -> (i32, i32) {
    %c0_i32 = arith.constant 0 : i32
    %c0_i32_0 = arith.constant 0 : i32
    %c0_i32_1 = arith.constant 0 : i32
    return %c0_i32, %c0_i32_0 : i32, i32
  }
  func.func @transform_3(%arg0: i32) -> (i32, i32) {
    %c0_i32 = arith.constant 0 : i32
    %c0_i32_0 = arith.constant 0 : i32
    %c0_i32_1 = arith.constant 0 : i32
    return %c0_i32, %c0_i32_0 : i32, i32
  }
  func.func @transform_4(%arg0: i32) -> (i32, i32) {
    %c0_i32 = arith.constant 0 : i32
    %c0_i32_0 = arith.constant 0 : i32
    %c0_i32_1 = arith.constant 0 : i32
    return %c0_i32, %c0_i32_0 : i32, i32
  }
  func.func @transform_5(%arg0: i32) -> (i32, i32, i32) {
    %c0_i32 = arith.constant 0 : i32
    %c0_i32_0 = arith.constant 0 : i32
    %c0_i32_1 = arith.constant 0 : i32
    return %arg0, %c0_i32, %c0_i32_0 : i32, i32, i32
  }
}

</mosaic_0001>

<llo_original>
// kernel: lstm_forward.1
$region0: #{lstm_forward.1}
  #allocation0 [shape = 'u32[]', space=smem, size = 0x4, offset = 0x4, fixed_abs, tag = 'smem constant byte address 0x4 - core index']
  #allocation1 [shape = 'u32[144,128]{1,0:T(1,128)}', space=vmem, size = 0x12000, scoped, tag = 'internal scratch']
  #allocation2 [shape = 'f32[64,512]{1,0:T(8,128)}', space=vmem, size = 0x20000, scoped, tag = 'scratch operand']
  #allocation3 [shape = 'f32[1,1]{1,0:T(1,128)S(1)}', space=vmem, size = 0x200, scoped, tag = 'scoped memory for lstm_forward.1']
  %s0 = inlined_call_operand.vmem [shape: bf16[1,64,128], index: 0, kind: input, shape index: {}]
  %s1 = inlined_call_operand.vmem [shape: bf16[128,512], index: 1, kind: input, shape index: {}]
  %s2 = inlined_call_operand.vmem [shape: bf16[128,512], index: 2, kind: input, shape index: {}]
  %s3 = inlined_call_operand.vmem [shape: f32[1,128], index: 3, kind: input, shape index: {}]
  %s4 = inlined_call_operand.<no memory space> [shape: f32[1,1], index: 4, kind: input, shape index: {}]
  %s5 = inlined_call_operand.vmem [shape: f32[1,8,128], index: 5, kind: output, shape index: {}]
  %s6 = sld [smem:[#allocation0]]
  $region30: #{lstm_forward.1} parent=0
    _
  %s8 = ssub.s32 1, %s6
  %s9 = scalar_select 0, %s8, %s6
  %v10 = vstv %s4
  %11 = vst [vmem:[#allocation3] sm:$0x1] %v10
  // Predicated region
  $region2: #{lstm_forward.1} parent=0 // pred_check
    _
  $region3: #{lstm_forward.1} parent=0 // pred_check_branch
    %13 = sbr.rel (0) target = $region5
  $region4: #{lstm_forward.1} parent=0 // pred_region
    _
  $region5: #{lstm_forward.1} parent=0 // pred_fallthru
    _
  // Predicated region
  $region6: #{lstm_forward.1} parent=0 // pred_check
    _
  $region7: #{lstm_forward.1} parent=0 // pred_check_branch
    %15 = sbr.rel (0) target = $region9
  $region8: #{lstm_forward.1} parent=0 // pred_region
    _
  $region9: #{lstm_forward.1} parent=0 // pred_fallthru
    _
  // Predicated region
  $region10: #{lstm_forward.1} parent=0 // pred_check
    _
  $region11: #{lstm_forward.1} parent=0 // pred_check_branch
    %17 = sbr.rel (0) target = $region13
  $region12: #{lstm_forward.1} parent=0 // pred_region
    _
  $region13: #{lstm_forward.1} parent=0 // pred_fallthru
    _
  // Predicated region
  $region14: #{lstm_forward.1} parent=0 // pred_check
    _
  $region15: #{lstm_forward.1} parent=0 // pred_check_branch
    %19 = sbr.rel (0) target = $region17
  $region16: #{lstm_forward.1} parent=0 // pred_region
    _
  $region17: #{lstm_forward.1} parent=0 // pred_fallthru
    _
  // Predicated region
  $region18: #{lstm_forward.1} parent=0 // pred_check
    _
  $region19: #{lstm_forward.1} parent=0 // pred_check_branch
    %21 = sbr.rel (0) target = $region21
  $region20: #{lstm_forward.1} parent=0 // pred_region
    _
  $region21: #{lstm_forward.1} parent=0 // pred_fallthru
    _
  %v23 = vld [vmem:[%s0] sm:$0xf]
  %v24 = vld [vmem:[%s0 + $0x4] sm:$0xf]
  %v25 = vld [vmem:[%s0 + $0x8] sm:$0xf]
  %v26 = vld [vmem:[%s0 + $0xc] sm:$0xf]
  %v27 = vld [vmem:[%s0 + $0x10] sm:$0xf]
  %v28 = vld [vmem:[%s0 + $0x14] sm:$0xf]
  %v29 = vld [vmem:[%s0 + $0x18] sm:$0xf]
  %v30 = vld [vmem:[%s0 + $0x1c] sm:$0xf]
  %v31 = vld [vmem:[%s1] sm:$0xff]
  %v32 = vld [vmem:[%s1 + $0x8] sm:$0xff]
  %v33 = vld [vmem:[%s1 + $0x10] sm:$0xff]
  %v34 = vld [vmem:[%s1 + $0x18] sm:$0xff]
  %v35 = vld [vmem:[%s1 + $0x20] sm:$0xff]
  %v36 = vld [vmem:[%s1 + $0x28] sm:$0xff]
  %v37 = vld [vmem:[%s1 + $0x30] sm:$0xff]
  %v38 = vld [vmem:[%s1 + $0x38] sm:$0xff]
  %v39 = vld [vmem:[%s1 + $0x40] sm:$0xff]
  %v40 = vld [vmem:[%s1 + $0x48] sm:$0xff]
  %v41 = vld [vmem:[%s1 + $0x50] sm:$0xff]
  %v42 = vld [vmem:[%s1 + $0x58] sm:$0xff]
  %v43 = vld [vmem:[%s1 + $0x60] sm:$0xff]
  %v44 = vld [vmem:[%s1 + $0x68] sm:$0xff]
  %v45 = vld [vmem:[%s1 + $0x70] sm:$0xff]
  %v46 = vld [vmem:[%s1 + $0x78] sm:$0xff]
  %v47 = vld [vmem:[%s1 + $0x80] sm:$0xff]
  %v48 = vld [vmem:[%s1 + $0x88] sm:$0xff]
  %v49 = vld [vmem:[%s1 + $0x90] sm:$0xff]
  %v50 = vld [vmem:[%s1 + $0x98] sm:$0xff]
  %v51 = vld [vmem:[%s1 + $0xa0] sm:$0xff]
  %v52 = vld [vmem:[%s1 + $0xa8] sm:$0xff]
  %v53 = vld [vmem:[%s1 + $0xb0] sm:$0xff]
  %v54 = vld [vmem:[%s1 + $0xb8] sm:$0xff]
  %v55 = vld [vmem:[%s1 + $0xc0] sm:$0xff]
  %v56 = vld [vmem:[%s1 + $0xc8] sm:$0xff]
  %v57 = vld [vmem:[%s1 + $0xd0] sm:$0xff]
  %v58 = vld [vmem:[%s1 + $0xd8] sm:$0xff]
  %v59 = vld [vmem:[%s1 + $0xe0] sm:$0xff]
  %v60 = vld [vmem:[%s1 + $0xe8] sm:$0xff]
  %v61 = vld [vmem:[%s1 + $0xf0] sm:$0xff]
  %v62 = vld [vmem:[%s1 + $0xf8] sm:$0xff]
  %v71 = vunpack.c.l.b16 %v23
  %v72 = vunpack.c.l.b16 %v24
  %v73 = vunpack.c.l.b16 %v25
  %v74 = vunpack.c.l.b16 %v26
  %v75 = vunpack.c.l.b16 %v27
  %v76 = vunpack.c.l.b16 %v28
  %v77 = vunpack.c.l.b16 %v29
  %v78 = vunpack.c.l.b16 %v30
  %v79 = vpack.c.b16 %v72, %v71
  %v80 = vpack.c.b16 %v74, %v73
  %v81 = vpack.c.b16 %v76, %v75
  %v82 = vpack.c.b16 %v78, %v77
  %v119 = vunpack.c.l.b16 %v31
  %v120 = vunpack.c.h.b16 %v31
  %v121 = vunpack.c.l.b16 %v32
  %v122 = vunpack.c.h.b16 %v32
  %v123 = vunpack.c.l.b16 %v33
  %v124 = vunpack.c.h.b16 %v33
  %v125 = vunpack.c.l.b16 %v34
  %v126 = vunpack.c.h.b16 %v34
  %v127 = vunpack.c.l.b16 %v35
  %v128 = vunpack.c.h.b16 %v35
  %v129 = vunpack.c.l.b16 %v36
  %v130 = vunpack.c.h.b16 %v36
  %v131 = vunpack.c.l.b16 %v37
  %v132 = vunpack.c.h.b16 %v37
  %v133 = vunpack.c.l.b16 %v38
  %v134 = vunpack.c.h.b16 %v38
  %v135 = vunpack.c.l.b16 %v39
  %v136 = vunpack.c.h.b16 %v39
  %v137 = vunpack.c.l.b16 %v40
  %v138 = vunpack.c.h.b16 %v40
  %v139 = vunpack.c.l.b16 %v41
  %v140 = vunpack.c.h.b16 %v41
  %v141 = vunpack.c.l.b16 %v42
  %v142 = vunpack.c.h.b16 %v42
  %v143 = vunpack.c.l.b16 %v43
  %v144 = vunpack.c.h.b16 %v43
  %v145 = vunpack.c.l.b16 %v44
  %v146 = vunpack.c.h.b16 %v44
  %v147 = vunpack.c.l.b16 %v45
  %v148 = vunpack.c.h.b16 %v45
  %v149 = vunpack.c.l.b16 %v46
  %v150 = vunpack.c.h.b16 %v46
  %v151 = vunpack.c.l.b16 %v47
  %v152 = vunpack.c.h.b16 %v47
  %v153 = vunpack.c.l.b16 %v48
  %v154 = vunpack.c.h.b16 %v48
  %v155 = vunpack.c.l.b16 %v49
  %v156 = vunpack.c.h.b16 %v49
  %v157 = vunpack.c.l.b16 %v50
  %v158 = vunpack.c.h.b16 %v50
  %v159 = vunpack.c.l.b16 %v51
  %v160 = vunpack.c.h.b16 %v51
  %v161 = vunpack.c.l.b16 %v52
  %v162 = vunpack.c.h.b16 %v52
  %v163 = vunpack.c.l.b16 %v53
  %v164 = vunpack.c.h.b16 %v53
  %v165 = vunpack.c.l.b16 %v54
  %v166 = vunpack.c.h.b16 %v54
  %v167 = vunpack.c.l.b16 %v55
  %v168 = vunpack.c.h.b16 %v55
  %v169 = vunpack.c.l.b16 %v56
  %v170 = vunpack.c.h.b16 %v56
  %v171 = vunpack.c.l.b16 %v57
  %v172 = vunpack.c.h.b16 %v57
  %v173 = vunpack.c.l.b16 %v58
  %v174 = vunpack.c.h.b16 %v58
  %v175 = vunpack.c.l.b16 %v59
  %v176 = vunpack.c.h.b16 %v59
  %v177 = vunpack.c.l.b16 %v60
  %v178 = vunpack.c.h.b16 %v60
  %v179 = vunpack.c.l.b16 %v61
  %v180 = vunpack.c.h.b16 %v61
  %v181 = vunpack.c.l.b16 %v62
  %v182 = vunpack.c.h.b16 %v62
  %v183 = vpack.c.b16 %v123, %v119
  %v184 = vpack.c.b16 %v124, %v120
  %v185 = vpack.c.b16 %v125, %v121
  %v186 = vpack.c.b16 %v126, %v122
  %v187 = vpack.c.b16 %v131, %v127
  %v188 = vpack.c.b16 %v132, %v128
  %v189 = vpack.c.b16 %v133, %v129
  %v190 = vpack.c.b16 %v134, %v130
  %v191 = vpack.c.b16 %v139, %v135
  %v192 = vpack.c.b16 %v140, %v136
  %v193 = vpack.c.b16 %v141, %v137
  %v194 = vpack.c.b16 %v142, %v138
  %v195 = vpack.c.b16 %v147, %v143
  %v196 = vpack.c.b16 %v148, %v144
  %v197 = vpack.c.b16 %v149, %v145
  %v198 = vpack.c.b16 %v150, %v146
  %v199 = vpack.c.b16 %v155, %v151
  %v200 = vpack.c.b16 %v156, %v152
  %v201 = vpack.c.b16 %v157, %v153
  %v202 = vpack.c.b16 %v158, %v154
  %v203 = vpack.c.b16 %v163, %v159
  %v204 = vpack.c.b16 %v164, %v160
  %v205 = vpack.c.b16 %v165, %v161
  %v206 = vpack.c.b16 %v166, %v162
  %v207 = vpack.c.b16 %v171, %v167
  %v208 = vpack.c.b16 %v172, %v168
  %v209 = vpack.c.b16 %v173, %v169
  %v210 = vpack.c.b16 %v174, %v170
  %v211 = vpack.c.b16 %v179, %v175
  %v212 = vpack.c.b16 %v180, %v176
  %v213 = vpack.c.b16 %v181, %v177
  %v214 = vpack.c.b16 %v182, %v178
  %247 = vmatprep.subr.bf16.mxu0 %v184
  %248 = vmatpush1.bf16.msra.mxu0 %v183
  %249 = vmatprep.subr.bf16.mxu0 %v188
  %250 = vmatpush1.bf16.msra.mxu0 %v187
  %251 = vmatprep.subr.bf16.mxu0 %v192
  %252 = vmatpush1.bf16.msra.mxu0 %v191
  %253 = vmatprep.subr.bf16.mxu0 %v196
  %254 = vmatpush1.bf16.msra.mxu0 %v195
  %255 = vmatprep.subr.bf16.mxu0 %v200
  %256 = vmatpush1.bf16.msra.mxu0 %v199
  %257 = vmatprep.subr.bf16.mxu0 %v204
  %258 = vmatpush1.bf16.msra.mxu0 %v203
  %259 = vmatprep.subr.bf16.mxu0 %v208
  %260 = vmatpush1.bf16.msra.mxu0 %v207
  %261 = vmatprep.subr.bf16.mxu0 %v212
  %262 = vmatpush1.bf16.msra.mxu0 %v211
  %263 = vmatprep.subr.bf16.mxu0 0
  %264 = vmatpush1.bf16.msra.mxu0 0
  %265 = vmatprep.subr.bf16.mxu0 0
  %266 = vmatpush1.bf16.msra.mxu0 0
  %267 = vmatprep.subr.bf16.mxu0 0
  %268 = vmatpush1.bf16.msra.mxu0 0
  %269 = vmatprep.subr.bf16.mxu0 0
  %270 = vmatpush1.bf16.msra.mxu0 0
  %271 = vmatprep.subr.bf16.mxu0 0
  %272 = vmatpush1.bf16.msra.mxu0 0
  %273 = vmatprep.subr.bf16.mxu0 0
  %274 = vmatpush1.bf16.msra.mxu0 0
  %275 = vmatprep.subr.bf16.mxu0 0
  %276 = vmatpush1.bf16.msra.mxu0 0
  %277 = vmatprep.subr.bf16.mxu0 0
  %278 = vmatpush1.bf16.msra.mxu0 0
  %279 = vmatprep.mubr.bf16.mxu0 0
  %280 = vmatmul.mubr.bf16.gmra.mrb[0].mxu0 %v79
  %v281 = vpop.f32.mrb[0].mxu0
  %v282 = vadd.f32 0.0, %v281
  %v283 = vpop.f32.mrb[0].mxu0
  %v284 = vadd.f32 0.0, %v283
  %v285 = vpop.f32.mrb[0].mxu0
  %v286 = vadd.f32 0.0, %v285
  %v287 = vpop.f32.mrb[0].mxu0
  %v288 = vadd.f32 0.0, %v287
  %289 = vmatprep.mubr.bf16.mxu0 0
  %290 = vmatmul.mubr.bf16.gmra.mrb[0].mxu0 %v80
  %v291 = vpop.f32.mrb[0].mxu0
  %v292 = vadd.f32 0.0, %v291
  %v293 = vpop.f32.mrb[0].mxu0
  %v294 = vadd.f32 0.0, %v293
  %v295 = vpop.f32.mrb[0].mxu0
  %v296 = vadd.f32 0.0, %v295
  %v297 = vpop.f32.mrb[0].mxu0
  %v298 = vadd.f32 0.0, %v297
  %299 = vmatprep.mubr.bf16.mxu0 0
  %300 = vmatmul.mubr.bf16.gmra.mrb[0].mxu0 %v81
  %v301 = vpop.f32.mrb[0].mxu0
  %v302 = vadd.f32 0.0, %v301
  %v303 = vpop.f32.mrb[0].mxu0
  %v304 = vadd.f32 0.0, %v303
  %v305 = vpop.f32.mrb[0].mxu0
  %v306 = vadd.f32 0.0, %v305
  %v307 = vpop.f32.mrb[0].mxu0
  %v308 = vadd.f32 0.0, %v307
  %309 = vmatprep.mubr.bf16.mxu0 0
  %310 = vmatmul.mubr.bf16.gmra.mrb[0].mxu0 %v82
  %v311 = vpop.f32.mrb[0].mxu0
  %v312 = vadd.f32 0.0, %v311
  %v313 = vpop.f32.mrb[0].mxu0
  %v314 = vadd.f32 0.0, %v313
  %v315 = vpop.f32.mrb[0].mxu0
  %v316 = vadd.f32 0.0, %v315
  %v317 = vpop.f32.mrb[0].mxu0
  %v318 = vadd.f32 0.0, %v317
  %319 = vdwg.mxu0
  %320 = vmatprep.subr.bf16.mxu0 %v186
  %321 = vmatpush1.bf16.msra.mxu0 %v185
  %322 = vmatprep.subr.bf16.mxu0 %v190
  %323 = vmatpush1.bf16.msra.mxu0 %v189
  %324 = vmatprep.subr.bf16.mxu0 %v194
  %325 = vmatpush1.bf16.msra.mxu0 %v193
  %326 = vmatprep.subr.bf16.mxu0 %v198
  %327 = vmatpush1.bf16.msra.mxu0 %v197
  %328 = vmatprep.subr.bf16.mxu0 %v202
  %329 = vmatpush1.bf16.msra.mxu0 %v201
  %330 = vmatprep.subr.bf16.mxu0 %v206
  %331 = vmatpush1.bf16.msra.mxu0 %v205
  %332 = vmatprep.subr.bf16.mxu0 %v210
  %333 = vmatpush1.bf16.msra.mxu0 %v209
  %334 = vmatprep.subr.bf16.mxu0 %v214
  %335 = vmatpush1.bf16.msra.mxu0 %v213
  %336 = vmatprep.subr.bf16.mxu0 0
  %337 = vmatpush1.bf16.msra.mxu0 0
  %338 = vmatprep.subr.bf16.mxu0 0
  %339 = vmatpush1.bf16.msra.mxu0 0
  %340 = vmatprep.subr.bf16.mxu0 0
  %341 = vmatpush1.bf16.msra.mxu0 0
  %342 = vmatprep.subr.bf16.mxu0 0
  %343 = vmatpush1.bf16.msra.mxu0 0
  %344 = vmatprep.subr.bf16.mxu0 0
  %345 = vmatpush1.bf16.msra.mxu0 0
  %346 = vmatprep.subr.bf16.mxu0 0
  %347 = vmatpush1.bf16.msra.mxu0 0
  %348 = vmatprep.subr.bf16.mxu0 0
  %349 = vmatpush1.bf16.msra.mxu0 0
  %350 = vmatprep.subr.bf16.mxu0 0
  %351 = vmatpush1.bf16.msra.mxu0 0
  %352 = vmatprep.mubr.bf16.mxu0 0
  %353 = vmatmul.mubr.bf16.gmra.mrb[0].mxu0 %v79
  %v354 = vpop.f32.mrb[0].mxu0
  %v355 = vadd.f32 0.0, %v354
  %v356 = vpop.f32.mrb[0].mxu0
  %v357 = vadd.f32 0.0, %v356
  %v358 = vpop.f32.mrb[0].mxu0
  %v359 = vadd.f32 0.0, %v358
  %v360 = vpop.f32.mrb[0].mxu0
  %v361 = vadd.f32 0.0, %v360
  %362 = vmatprep.mubr.bf16.mxu0 0
  %363 = vmatmul.mubr.bf16.gmra.mrb[0].mxu0 %v80
  %v364 = vpop.f32.mrb[0].mxu0
  %v365 = vadd.f32 0.0, %v364
  %v366 = vpop.f32.mrb[0].mxu0
  %v367 = vadd.f32 0.0, %v366
  %v368 = vpop.f32.mrb[0].mxu0
  %v369 = vadd.f32 0.0, %v368
  %v370 = vpop.f32.mrb[0].mxu0
  %v371 = vadd.f32 0.0, %v370
  %372 = vmatprep.mubr.bf16.mxu0 0
  %373 = vmatmul.mubr.bf16.gmra.mrb[0].mxu0 %v81
  %v374 = vpop.f32.mrb[0].mxu0
  %v375 = vadd.f32 0.0, %v374
  %v376 = vpop.f32.mrb[0].mxu0
  %v377 = vadd.f32 0.0, %v376
  %v378 = vpop.f32.mrb[0].mxu0
  %v379 = vadd.f32 0.0, %v378
  %v380 = vpop.f32.mrb[0].mxu0
  %v381 = vadd.f32 0.0, %v380
  %382 = vmatprep.mubr.bf16.mxu0 0
  %383 = vmatmul.mubr.bf16.gmra.mrb[0].mxu0 %v82
  %v384 = vpop.f32.mrb[0].mxu0
  %v385 = vadd.f32 0.0, %v384
  %v386 = vpop.f32.mrb[0].mxu0
  %v387 = vadd.f32 0.0, %v386
  %v388 = vpop.f32.mrb[0].mxu0
  %v389 = vadd.f32 0.0, %v388
  %v390 = vpop.f32.mrb[0].mxu0
  %v391 = vadd.f32 0.0, %v390
  %392 = vdwg.mxu0
  %393 = vst [vmem:[#allocation2] sm:$0xff] %v282
  %394 = vst [vmem:[#allocation2 + $0x8] sm:$0xff] %v284
  %395 = vst [vmem:[#allocation2 + $0x10] sm:$0xff] %v355
  %396 = vst [vmem:[#allocation2 + $0x18] sm:$0xff] %v357
  %397 = vst [vmem:[#allocation2 + $0x20] sm:$0xff] %v286
  %398 = vst [vmem:[#allocation2 + $0x28] sm:$0xff] %v288
  %399 = vst [vmem:[#allocation2 + $0x30] sm:$0xff] %v359
  %400 = vst [vmem:[#allocation2 + $0x38] sm:$0xff] %v361
  %401 = vst [vmem:[#allocation2 + $0x40] sm:$0xff] %v292
  %402 = vst [vmem:[#allocation2 + $0x48] sm:$0xff] %v294
  %403 = vst [vmem:[#allocation2 + $0x50] sm:$0xff] %v365
  %404 = vst [vmem:[#allocation2 + $0x58] sm:$0xff] %v367
  %405 = vst [vmem:[#allocation2 + $0x60] sm:$0xff] %v296
  %406 = vst [vmem:[#allocation2 + $0x68] sm:$0xff] %v298
  %407 = vst [vmem:[#allocation2 + $0x70] sm:$0xff] %v369
  %408 = vst [vmem:[#allocation2 + $0x78] sm:$0xff] %v371
  %409 = vst [vmem:[#allocation2 + $0x80] sm:$0xff] %v302
  %410 = vst [vmem:[#allocation2 + $0x88] sm:$0xff] %v304
  %411 = vst [vmem:[#allocation2 + $0x90] sm:$0xff] %v375
  %412 = vst [vmem:[#allocation2 + $0x98] sm:$0xff] %v377
  %413 = vst [vmem:[#allocation2 + $0xa0] sm:$0xff] %v306
  %414 = vst [vmem:[#allocation2 + $0xa8] sm:$0xff] %v308
  %415 = vst [vmem:[#allocation2 + $0xb0] sm:$0xff] %v379
  %416 = vst [vmem:[#allocation2 + $0xb8] sm:$0xff] %v381
  %417 = vst [vmem:[#allocation2 + $0xc0] sm:$0xff] %v312
  %418 = vst [vmem:[#allocation2 + $0xc8] sm:$0xff] %v314
  %419 = vst [vmem:[#allocation2 + $0xd0] sm:$0xff] %v385
  %420 = vst [vmem:[#allocation2 + $0xd8] sm:$0xff] %v387
  %421 = vst [vmem:[#allocation2 + $0xe0] sm:$0xff] %v316
  %422 = vst [vmem:[#allocation2 + $0xe8] sm:$0xff] %v318
  %423 = vst [vmem:[#allocation2 + $0xf0] sm:$0xff] %v389
  %424 = vst [vmem:[#allocation2 + $0xf8] sm:$0xff] %v391
  %v425 = vld [vmem:[%s2] sm:$0xff]
  %v426 = vld [vmem:[%s2 + $0x8] sm:$0xff]
  %v427 = vld [vmem:[%s2 + $0x10] sm:$0xff]
  %v428 = vld [vmem:[%s2 + $0x18] sm:$0xff]
  %v429 = vld [vmem:[%s2 + $0x20] sm:$0xff]
  %v430 = vld [vmem:[%s2 + $0x28] sm:$0xff]
  %v431 = vld [vmem:[%s2 + $0x30] sm:$0xff]
  %v432 = vld [vmem:[%s2 + $0x38] sm:$0xff]
  %v433 = vld [vmem:[%s2 + $0x40] sm:$0xff]
  %v434 = vld [vmem:[%s2 + $0x48] sm:$0xff]
  %v435 = vld [vmem:[%s2 + $0x50] sm:$0xff]
  %v436 = vld [vmem:[%s2 + $0x58] sm:$0xff]
  %v437 = vld [vmem:[%s2 + $0x60] sm:$0xff]
  %v438 = vld [vmem:[%s2 + $0x68] sm:$0xff]
  %v439 = vld [vmem:[%s2 + $0x70] sm:$0xff]
  %v440 = vld [vmem:[%s2 + $0x78] sm:$0xff]
  %v441 = vld [vmem:[%s2 + $0x80] sm:$0xff]
  %v442 = vld [vmem:[%s2 + $0x88] sm:$0xff]
  %v443 = vld [vmem:[%s2 + $0x90] sm:$0xff]
  %v444 = vld [vmem:[%s2 + $0x98] sm:$0xff]
  %v445 = vld [vmem:[%s2 + $0xa0] sm:$0xff]
  %v446 = vld [vmem:[%s2 + $0xa8] sm:$0xff]
  %v447 = vld [vmem:[%s2 + $0xb0] sm:$0xff]
  %v448 = vld [vmem:[%s2 + $0xb8] sm:$0xff]
  %v449 = vld [vmem:[%s2 + $0xc0] sm:$0xff]
  %v450 = vld [vmem:[%s2 + $0xc8] sm:$0xff]
  %v451 = vld [vmem:[%s2 + $0xd0] sm:$0xff]
  %v452 = vld [vmem:[%s2 + $0xd8] sm:$0xff]
  %v453 = vld [vmem:[%s2 + $0xe0] sm:$0xff]
  %v454 = vld [vmem:[%s2 + $0xe8] sm:$0xff]
  %v455 = vld [vmem:[%s2 + $0xf0] sm:$0xff]
  %v456 = vld [vmem:[%s2 + $0xf8] sm:$0xff]
  %v457 = vld [vmem:[#allocation2] sm:$0xff]
  %v458 = vld [vmem:[#allocation2 + $0x8] sm:$0xff]
  %v459 = vld [vmem:[#allocation2 + $0x10] sm:$0xff]
  %v460 = vld [vmem:[#allocation2 + $0x18] sm:$0xff]
  %v461 = vtanh.pop %v457
  %v462 = vmul.f32 %v461, 0.5
  %v463 = vadd.f32 %v462, 0.5
  %v464 = vtanh.pop %v458
  %v465 = vmul.f32 %v464, 0.5
  %v466 = vadd.f32 %v465, 0.5
  %v467 = vtanh.pop %v459
  %v468 = vtanh.pop %v460
  %v469 = vmul.f32 %v468, 0.5
  %v470 = vadd.f32 %v469, 0.5
  %v471 = vmul.f32 %v466, 0.0
  %v472 = vmul.f32 %v463, %v467
  %v473 = vadd.f32 %v471, %v472
  %v474 = vtanh.pop %v473
  %v475 = vmul.f32 %v470, %v474
  %v476 = vpack.c.bf16 %v475, %v475
  %v477 = vld [vmem:[#allocation2 + $0x20] sm:$0xff]
  %v478 = vld [vmem:[#allocation2 + $0x28] sm:$0xff]
  %v479 = vld [vmem:[#allocation2 + $0x30] sm:$0xff]
  %v480 = vld [vmem:[#allocation2 + $0x38] sm:$0xff]
  %v513 = vunpack.c.l.b16 %v425
  %v514 = vunpack.c.h.b16 %v425
  %v515 = vunpack.c.l.b16 %v426
  %v516 = vunpack.c.h.b16 %v426
  %v517 = vunpack.c.l.b16 %v427
  %v518 = vunpack.c.h.b16 %v427
  %v519 = vunpack.c.l.b16 %v428
  %v520 = vunpack.c.h.b16 %v428
  %v521 = vunpack.c.l.b16 %v429
  %v522 = vunpack.c.h.b16 %v429
  %v523 = vunpack.c.l.b16 %v430
  %v524 = vunpack.c.h.b16 %v430
  %v525 = vunpack.c.l.b16 %v431
  %v526 = vunpack.c.h.b16 %v431
  %v527 = vunpack.c.l.b16 %v432
  %v528 = vunpack.c.h.b16 %v432
  %v529 = vunpack.c.l.b16 %v433
  %v530 = vunpack.c.h.b16 %v433
  %v531 = vunpack.c.l.b16 %v434
  %v532 = vunpack.c.h.b16 %v434
  %v533 = vunpack.c.l.b16 %v435
  %v534 = vunpack.c.h.b16 %v435
  %v535 = vunpack.c.l.b16 %v436
  %v536 = vunpack.c.h.b16 %v436
  %v537 = vunpack.c.l.b16 %v437
  %v538 = vunpack.c.h.b16 %v437
  %v539 = vunpack.c.l.b16 %v438
  %v540 = vunpack.c.h.b16 %v438
  %v541 = vunpack.c.l.b16 %v439
  %v542 = vunpack.c.h.b16 %v439
  %v543 = vunpack.c.l.b16 %v440
  %v544 = vunpack.c.h.b16 %v440
  %v545 = vunpack.c.l.b16 %v441
  %v546 = vunpack.c.h.b16 %v441
  %v547 = vunpack.c.l.b16 %v442
  %v548 = vunpack.c.h.b16 %v442
  %v549 = vunpack.c.l.b16 %v443
  %v550 = vunpack.c.h.b16 %v443
  %v551 = vunpack.c.l.b16 %v444
  %v552 = vunpack.c.h.b16 %v444
  %v553 = vunpack.c.l.b16 %v445
  %v554 = vunpack.c.h.b16 %v445
  %v555 = vunpack.c.l.b16 %v446
  %v556 = vunpack.c.h.b16 %v446
  %v557 = vunpack.c.l.b16 %v447
  %v558 = vunpack.c.h.b16 %v447
  %v559 = vunpack.c.l.b16 %v448
  %v560 = vunpack.c.h.b16 %v448
  %v561 = vunpack.c.l.b16 %v449
  %v562 = vunpack.c.h.b16 %v449
  %v563 = vunpack.c.l.b16 %v450
  %v564 = vunpack.c.h.b16 %v450
  %v565 = vunpack.c.l.b16 %v451
  %v566 = vunpack.c.h.b16 %v451
  %v567 = vunpack.c.l.b16 %v452
  %v568 = vunpack.c.h.b16 %v452
  %v569 = vunpack.c.l.b16 %v453
  %v570 = vunpack.c.h.b16 %v453
  %v571 = vunpack.c.l.b16 %v454
  %v572 = vunpack.c.h.b16 %v454
  %v573 = vunpack.c.l.b16 %v455
  %v574 = vunpack.c.h.b16 %v455
  %v575 = vunpack.c.l.b16 %v456
  %v576 = vunpack.c.h.b16 %v456
  %v577 = vpack.c.b16 %v517, %v513
  %v578 = vpack.c.b16 %v518, %v514
  %v579 = vpack.c.b16 %v519, %v515
  %v580 = vpack.c.b16 %v520, %v516
  %v581 = vpack.c.b16 %v525, %v521
  %v582 = vpack.c.b16 %v526, %v522
  %v583 = vpack.c.b16 %v527, %v523
  %v584 = vpack.c.b16 %v528, %v524
  %v585 = vpack.c.b16 %v533, %v529
  %v586 = vpack.c.b16 %v534, %v530
  %v587 = vpack.c.b16 %v535, %v531
  %v588 = vpack.c.b16 %v536, %v532
  %v589 = vpack.c.b16 %v541, %v537
  %v590 = vpack.c.b16 %v542, %v538
  %v591 = vpack.c.b16 %v543, %v539
  %v592 = vpack.c.b16 %v544, %v540
  %v593 = vpack.c.b16 %v549, %v545
  %v594 = vpack.c.b16 %v550, %v546
  %v595 = vpack.c.b16 %v551, %v547
  %v596 = vpack.c.b16 %v552, %v548
  %v597 = vpack.c.b16 %v557, %v553
  %v598 = vpack.c.b16 %v558, %v554
  %v599 = vpack.c.b16 %v559, %v555
  %v600 = vpack.c.b16 %v560, %v556
  %v601 = vpack.c.b16 %v565, %v561
  %v602 = vpack.c.b16 %v566, %v562
  %v603 = vpack.c.b16 %v567, %v563
  %v604 = vpack.c.b16 %v568, %v564
  %v605 = vpack.c.b16 %v573, %v569
  %v606 = vpack.c.b16 %v574, %v570
  %v607 = vpack.c.b16 %v575, %v571
  %v608 = vpack.c.b16 %v576, %v572
  %641 = vmatprep.subr.bf16.mxu0 %v578
  %642 = vmatpush1.bf16.msra.mxu0 %v577
  %643 = vmatprep.subr.bf16.mxu0 %v582
  %644 = vmatpush1.bf16.msra.mxu0 %v581
  %645 = vmatprep.subr.bf16.mxu0 %v586
  %646 = vmatpush1.bf16.msra.mxu0 %v585
  %647 = vmatprep.subr.bf16.mxu0 %v590
  %648 = vmatpush1.bf16.msra.mxu0 %v589
  %649 = vmatprep.subr.bf16.mxu0 %v594
  %650 = vmatpush1.bf16.msra.mxu0 %v593
  %651 = vmatprep.subr.bf16.mxu0 %v598
  %652 = vmatpush1.bf16.msra.mxu0 %v597
  %653 = vmatprep.subr.bf16.mxu0 %v602
  %654 = vmatpush1.bf16.msra.mxu0 %v601
  %655 = vmatprep.subr.bf16.mxu0 %v606
  %656 = vmatpush1.bf16.msra.mxu0 %v605
  %657 = vmatprep.subr.bf16.mxu0 0
  %658 = vmatpush1.bf16.msra.mxu0 0
  %659 = vmatprep.subr.bf16.mxu0 0
  %660 = vmatpush1.bf16.msra.mxu0 0
  %661 = vmatprep.subr.bf16.mxu0 0
  %662 = vmatpush1.bf16.msra.mxu0 0
  %663 = vmatprep.subr.bf16.mxu0 0
  %664 = vmatpush1.bf16.msra.mxu0 0
  %665 = vmatprep.subr.bf16.mxu0 0
  %666 = vmatpush1.bf16.msra.mxu0 0
  %667 = vmatprep.subr.bf16.mxu0 0
  %668 = vmatpush1.bf16.msra.mxu0 0
  %669 = vmatprep.subr.bf16.mxu0 0
  %670 = vmatpush1.bf16.msra.mxu0 0
  %671 = vmatprep.subr.bf16.mxu0 0
  %672 = vmatpush1.bf16.msra.mxu0 0
  %673 = vmatprep.mubr.bf16.mxu0 0
  %674 = vmatmul.mubr.bf16.gmra.mrb[0].mxu0 %v476
  %v675 = vpop.f32.mrb[0].mxu0
  %v676 = vadd.f32 0.0, %v675
  %v677 = vpop.f32.mrb[0].mxu0
  %v678 = vadd.f32 0.0, %v677
  %v679 = vpop.f32.mrb[0].mxu0
  %v680 = vpop.f32.mrb[0].mxu0
  %681 = vdwg.mxu0
  %682 = vmatprep.subr.bf16.mxu0 %v580
  %683 = vmatpush1.bf16.msra.mxu0 %v579
  %684 = vmatprep.subr.bf16.mxu0 %v584
  %685 = vmatpush1.bf16.msra.mxu0 %v583
  %686 = vmatprep.subr.bf16.mxu0 %v588
  %687 = vmatpush1.bf16.msra.mxu0 %v587
  %688 = vmatprep.subr.bf16.mxu0 %v592
  %689 = vmatpush1.bf16.msra.mxu0 %v591
  %690 = vmatprep.subr.bf16.mxu0 %v596
  %691 = vmatpush1.bf16.msra.mxu0 %v595
  %692 = vmatprep.subr.bf16.mxu0 %v600
  %693 = vmatpush1.bf16.msra.mxu0 %v599
  %694 = vmatprep.subr.bf16.mxu0 %v604
  %695 = vmatpush1.bf16.msra.mxu0 %v603
  %696 = vmatprep.subr.bf16.mxu0 %v608
  %697 = vmatpush1.bf16.msra.mxu0 %v607
  %698 = vmatprep.subr.bf16.mxu0 0
  %699 = vmatpush1.bf16.msra.mxu0 0
  %700 = vmatprep.subr.bf16.mxu0 0
  %701 = vmatpush1.bf16.msra.mxu0 0
  %702 = vmatprep.subr.bf16.mxu0 0
  %703 = vmatpush1.bf16.msra.mxu0 0
  %704 = vmatprep.subr.bf16.mxu0 0
  %705 = vmatpush1.bf16.msra.mxu0 0
  %706 = vmatprep.subr.bf16.mxu0 0
  %707 = vmatpush1.bf16.msra.mxu0 0
  %708 = vmatprep.subr.bf16.mxu0 0
  %709 = vmatpush1.bf16.msra.mxu0 0
  %710 = vmatprep.subr.bf16.mxu0 0
  %711 = vmatpush1.bf16.msra.mxu0 0
  %712 = vmatprep.subr.bf16.mxu0 0
  %713 = vmatpush1.bf16.msra.mxu0 0
  %714 = vmatprep.mubr.bf16.mxu0 0
  %715 = vmatmul.mubr.bf16.gmra.mrb[0].mxu0 %v476
  %v716 = vpop.f32.mrb[0].mxu0
  %v717 = vadd.f32 0.0, %v716
  %v718 = vpop.f32.mrb[0].mxu0
  %v719 = vadd.f32 0.0, %v718
  %v720 = vpop.f32.mrb[0].mxu0
  %v721 = vpop.f32.mrb[0].mxu0
  %722 = vdwg.mxu0
  %v723 = vadd.f32 %v477, %v676
  %v724 = vadd.f32 %v478, %v678
  %v725 = vadd.f32 %v479, %v717
  %v726 = vadd.f32 %v480, %v719
  %v727 = vtanh.pop %v723
  %v728 = vmul.f32 %v727, 0.5
  %v729 = vadd.f32 %v728, 0.5
  %v730 = vtanh.pop %v724
  %v731 = vmul.f32 %v730, 0.5
  %v732 = vadd.f32 %v731, 0.5
  %v733 = vtanh.pop %v725
  %v734 = vtanh.pop %v726
  %v735 = vmul.f32 %v734, 0.5
  %v736 = vadd.f32 %v735, 0.5
  %v737 = vmul.f32 %v732, %v473
  %v738 = vmul.f32 %v729, %v733
  %v739 = vadd.f32 %v737, %v738
  %v740 = vtanh.pop %v739
  %v741 = vmul.f32 %v736, %v740
  %v742 = vpack.c.bf16 %v741, %v741
  %v743 = vld [vmem:[#allocation2 + $0x40] sm:$0xff]
  %v744 = vld [vmem:[#allocation2 + $0x48] sm:$0xff]
  %v745 = vld [vmem:[#allocation2 + $0x50] sm:$0xff]
  %v746 = vld [vmem:[#allocation2 + $0x58] sm:$0xff]
  %747 = vmatprep.subr.bf16.mxu0 %v578
  %748 = vmatpush1.bf16.msra.mxu0 %v577
  %749 = vmatprep.subr.bf16.mxu0 %v582
  %750 = vmatpush1.bf16.msra.mxu0 %v581
  %751 = vmatprep.subr.bf16.mxu0 %v586
  %752 = vmatpush1.bf16.msra.mxu0 %v585
  %753 = vmatprep.subr.bf16.mxu0 %v590
  %754 = vmatpush1.bf16.msra.mxu0 %v589
  %755 = vmatprep.subr.bf16.mxu0 %v594
  %756 = vmatpush1.bf16.msra.mxu0 %v593
  %757 = vmatprep.subr.bf16.mxu0 %v598
  %758 = vmatpush1.bf16.msra.mxu0 %v597
  %759 = vmatprep.subr.bf16.mxu0 %v602
  %760 = vmatpush1.bf16.msra.mxu0 %v601
  %761 = vmatprep.subr.bf16.mxu0 %v606
  %762 = vmatpush1.bf16.msra.mxu0 %v605
  %763 = vmatprep.subr.bf16.mxu0 0
  %764 = vmatpush1.bf16.msra.mxu0 0
  %765 = vmatprep.subr.bf16.mxu0 0
  %766 = vmatpush1.bf16.msra.mxu0 0
  %767 = vmatprep.subr.bf16.mxu0 0
  %768 = vmatpush1.bf16.msra.mxu0 0
  %769 = vmatprep.subr.bf16.mxu0 0
  %770 = vmatpush1.bf16.msra.mxu0 0
  %771 = vmatprep.subr.bf16.mxu0 0
  %772 = vmatpush1.bf16.msra.mxu0 0
  %773 = vmatprep.subr.bf16.mxu0 0
  %774 = vmatpush1.bf16.msra.mxu0 0
  %775 = vmatprep.subr.bf16.mxu0 0
  %776 = vmatpush1.bf16.msra.mxu0 0
  %777 = vmatprep.subr.bf16.mxu0 0
  %778 = vmatpush1.bf16.msra.mxu0 0
  %779 = vmatprep.mubr.bf16.mxu0 0
  %780 = vmatmul.mubr.bf16.gmra.mrb[0].mxu0 %v742
  %v781 = vpop.f32.mrb[0].mxu0
  %v782 = vadd.f32 0.0, %v781
  %v783 = vpop.f32.mrb[0].mxu0
  %v784 = vadd.f32 0.0, %v783
  %v785 = vpop.f32.mrb[0].mxu0
  %v786 = vpop.f32.mrb[0].mxu0
  %787 = vdwg.mxu0
  %788 = vmatprep.subr.bf16.mxu0 %v580
  %789 = vmatpush1.bf16.msra.mxu0 %v579
  %790 = vmatprep.subr.bf16.mxu0 %v584
  %791 = vmatpush1.bf16.msra.mxu0 %v583
  %792 = vmatprep.subr.bf16.mxu0 %v588
  %793 = vmatpush1.bf16.msra.mxu0 %v587
  %794 = vmatprep.subr.bf16.mxu0 %v592
  %795 = vmatpush1.bf16.msra.mxu0 %v591
  %796 = vmatprep.subr.bf16.mxu0 %v596
  %797 = vmatpush1.bf16.msra.mxu0 %v595
  %798 = vmatprep.subr.bf16.mxu0 %v600
  %799 = vmatpush1.bf16.msra.mxu0 %v599
  %800 = vmatprep.subr.bf16.mxu0 %v604
  %801 = vmatpush1.bf16.msra.mxu0 %v603
  %802 = vmatprep.subr.bf16.mxu0 %v608
  %803 = vmatpush1.bf16.msra.mxu0 %v607
  %804 = vmatprep.subr.bf16.mxu0 0
  %805 = vmatpush1.bf16.msra.mxu0 0
  %806 = vmatprep.subr.bf16.mxu0 0
  %807 = vmatpush1.bf16.msra.mxu0 0
  %808 = vmatprep.subr.bf16.mxu0 0
  %809 = vmatpush1.bf16.msra.mxu0 0
  %810 = vmatprep.subr.bf16.mxu0 0
  %811 = vmatpush1.bf16.msra.mxu0 0
  %812 = vmatprep.subr.bf16.mxu0 0
  %813 = vmatpush1.bf16.msra.mxu0 0
  %814 = vmatprep.subr.bf16.mxu0 0
  %815 = vmatpush1.bf16.msra.mxu0 0
  %816 = vmatprep.subr.bf16.mxu0 0
  %817 = vmatpush1.bf16.msra.mxu0 0
  %818 = vmatprep.subr.bf16.mxu0 0
  %819 = vmatpush1.bf16.msra.mxu0 0
  %820 = vmatprep.mubr.bf16.mxu0 0
  %821 = vmatmul.mubr.bf16.gmra.mrb[0].mxu0 %v742
  %v822 = vpop.f32.mrb[0].mxu0
  %v823 = vadd.f32 0.0, %v822
  %v824 = vpop.f32.mrb[0].mxu0
  %v825 = vadd.f32 0.0, %v824
  %v826 = vpop.f32.mrb[0].mxu0
  %v827 = vpop.f32.mrb[0].mxu0
  %828 = vdwg.mxu0
  %v829 = vadd.f32 %v743, %v782
  %v830 = vadd.f32 %v744, %v784
  %v831 = vadd.f32 %v745, %v823
  %v832 = vadd.f32 %v746, %v825
  %v833 = vtanh.pop %v829
  %v834 = vmul.f32 %v833, 0.5
  %v835 = vadd.f32 %v834, 0.5
  %v836 = vtanh.pop %v830
  %v837 = vmul.f32 %v836, 0.5
  %v838 = vadd.f32 %v837, 0.5
  %v839 = vtanh.pop %v831
  %v840 = vtanh.pop %v832
  %v841 = vmul.f32 %v840, 0.5
  %v842 = vadd.f32 %v841, 0.5
  %v843 = vmul.f32 %v838, %v739
  %v844 = vmul.f32 %v835, %v839
  %v845 = vadd.f32 %v843, %v844
  %v846 = vtanh.pop %v845
  %v847 = vmul.f32 %v842, %v846
  %v848 = vpack.c.bf16 %v847, %v847
  %v849 = vld [vmem:[#allocation2 + $0x60] sm:$0xff]
  %v850 = vld [vmem:[#allocation2 + $0x68] sm:$0xff]
  %v851 = vld [vmem:[#allocation2 + $0x70] sm:$0xff]
  %v852 = vld [vmem:[#allocation2 + $0x78] sm:$0xff]
  %853 = vmatprep.subr.bf16.mxu0 %v578
  %854 = vmatpush1.bf16.msra.mxu0 %v577
  %855 = vmatprep.subr.bf16.mxu0 %v582
  %856 = vmatpush1.bf16.msra.mxu0 %v581
  %857 = vmatprep.subr.bf16.mxu0 %v586
  %858 = vmatpush1.bf16.msra.mxu0 %v585
  %859 = vmatprep.subr.bf16.mxu0 %v590
  %860 = vmatpush1.bf16.msra.mxu0 %v589
  %861 = vmatprep.subr.bf16.mxu0 %v594
  %862 = vmatpush1.bf16.msra.mxu0 %v593
  %863 = vmatprep.subr.bf16.mxu0 %v598
  %864 = vmatpush1.bf16.msra.mxu0 %v597
  %865 = vmatprep.subr.bf16.mxu0 %v602
  %866 = vmatpush1.bf16.msra.mxu0 %v601
  %867 = vmatprep.subr.bf16.mxu0 %v606
  %868 = vmatpush1.bf16.msra.mxu0 %v605
  %869 = vmatprep.subr.bf16.mxu0 0
  %870 = vmatpush1.bf16.msra.mxu0 0
  %871 = vmatprep.subr.bf16.mxu0 0
  %872 = vmatpush1.bf16.msra.mxu0 0
  %873 = vmatprep.subr.bf16.mxu0 0
  %874 = vmatpush1.bf16.msra.mxu0 0
  %875 = vmatprep.subr.bf16.mxu0 0
  %876 = vmatpush1.bf16.msra.mxu0 0
  %877 = vmatprep.subr.bf16.mxu0 0
  %878 = vmatpush1.bf16.msra.mxu0 0
  %879 = vmatprep.subr.bf16.mxu0 0
  %880 = vmatpush1.bf16.msra.mxu0 0
  %881 = vmatprep.subr.bf16.mxu0 0
  %882 = vmatpush1.bf16.msra.mxu0 0
  %883 = vmatprep.subr.bf16.mxu0 0
  %884 = vmatpush1.bf16.msra.mxu0 0
  %885 = vmatprep.mubr.bf16.mxu0 0
  %886 = vmatmul.mubr.bf16.gmra.mrb[0].mxu0 %v848
  %v887 = vpop.f32.mrb[0].mxu0
  %v888 = vadd.f32 0.0, %v887
  %v889 = vpop.f32.mrb[0].mxu0
  %v890 = vadd.f32 0.0, %v889
  %v891 = vpop.f32.mrb[0].mxu0
  %v892 = vpop.f32.mrb[0].mxu0
  %893 = vdwg.mxu0
  %894 = vmatprep.subr.bf16.mxu0 %v580
  %895 = vmatpush1.bf16.msra.mxu0 %v579
  %896 = vmatprep.subr.bf16.mxu0 %v584
  %897 = vmatpush1.bf16.msra.mxu0 %v583
  %898 = vmatprep.subr.bf16.mxu0 %v588
  %899 = vmatpush1.bf16.msra.mxu0 %v587
  %900 = vmatprep.subr.bf16.mxu0 %v592
  %901 = vmatpush1.bf16.msra.mxu0 %v591
  %902 = vmatprep.subr.bf16.mxu0 %v596
  %903 = vmatpush1.bf16.msra.mxu0 %v595
  %904 = vmatprep.subr.bf16.mxu0 %v600
  %905 = vmatpush1.bf16.msra.mxu0 %v599
  %906 = vmatprep.subr.bf16.mxu0 %v604
  %907 = vmatpush1.bf16.msra.mxu0 %v603
  %908 = vmatprep.subr.bf16.mxu0 %v608
  %909 = vmatpush1.bf16.msra.mxu0 %v607
  %910 = vmatprep.subr.bf16.mxu0 0
  %911 = vmatpush1.bf16.msra.mxu0 0
  %912 = vmatprep.subr.bf16.mxu0 0
  %913 = vmatpush1.bf16.msra.mxu0 0
  %914 = vmatprep.subr.bf16.mxu0 0
  %915 = vmatpush1.bf16.msra.mxu0 0
  %916 = vmatprep.subr.bf16.mxu0 0
  %917 = vmatpush1.bf16.msra.mxu0 0
  %918 = vmatprep.subr.bf16.mxu0 0
  %919 = vmatpush1.bf16.msra.mxu0 0
  %920 = vmatprep.subr.bf16.mxu0 0
  %921 = vmatpush1.bf16.msra.mxu0 0
  %922 = vmatprep.subr.bf16.mxu0 0
  %923 = vmatpush1.bf16.msra.mxu0 0
  %924 = vmatprep.subr.bf16.mxu0 0
  %925 = vmatpush1.bf16.msra.mxu0 0
  %926 = vmatprep.mubr.bf16.mxu0 0
  %927 = vmatmul.mubr.bf16.gmra.mrb[0].mxu0 %v848
  %v928 = vpop.f32.mrb[0].mxu0
  %v929 = vadd.f32 0.0, %v928
  %v930 = vpop.f32.mrb[0].mxu0
  %v931 = vadd.f32 0.0, %v930
  %v932 = vpop.f32.mrb[0].mxu0
  %v933 = vpop.f32.mrb[0].mxu0
  %934 = vdwg.mxu0
  %v935 = vadd.f32 %v849, %v888
  %v936 = vadd.f32 %v850, %v890
  %v937 = vadd.f32 %v851, %v929
  %v938 = vadd.f32 %v852, %v931
  %v939 = vtanh.pop %v935
  %v940 = vmul.f32 %v939, 0.5
  %v941 = vadd.f32 %v940, 0.5
  %v942 = vtanh.pop %v936
  %v943 = vmul.f32 %v942, 0.5
  %v944 = vadd.f32 %v943, 0.5
  %v945 = vtanh.pop %v937
  %v946 = vtanh.pop %v938
  %v947 = vmul.f32 %v946, 0.5
  %v948 = vadd.f32 %v947, 0.5
  %v949 = vmul.f32 %v944, %v845
  %v950 = vmul.f32 %v941, %v945
  %v951 = vadd.f32 %v949, %v950
  %v952 = vtanh.pop %v951
  %v953 = vmul.f32 %v948, %v952
  %v954 = vpack.c.bf16 %v953, %v953
  %v955 = vld [vmem:[#allocation2 + $0x80] sm:$0xff]
  %v956 = vld [vmem:[#allocation2 + $0x88] sm:$0xff]
  %v957 = vld [vmem:[#allocation2 + $0x90] sm:$0xff]
  %v958 = vld [vmem:[#allocation2 + $0x98] sm:$0xff]
  %959 = vmatprep.subr.bf16.mxu0 %v578
  %960 = vmatpush1.bf16.msra.mxu0 %v577
  %961 = vmatprep.subr.bf16.mxu0 %v582
  %962 = vmatpush1.bf16.msra.mxu0 %v581
  %963 = vmatprep.subr.bf16.mxu0 %v586
  %964 = vmatpush1.bf16.msra.mxu0 %v585
  %965 = vmatprep.subr.bf16.mxu0 %v590
  %966 = vmatpush1.bf16.msra.mxu0 %v589
  %967 = vmatprep.subr.bf16.mxu0 %v594
  %968 = vmatpush1.bf16.msra.mxu0 %v593
  %969 = vmatprep.subr.bf16.mxu0 %v598
  %970 = vmatpush1.bf16.msra.mxu0 %v597
  %971 = vmatprep.subr.bf16.mxu0 %v602
  %972 = vmatpush1.bf16.msra.mxu0 %v601
  %973 = vmatprep.subr.bf16.mxu0 %v606
  %974 = vmatpush1.bf16.msra.mxu0 %v605
  %975 = vmatprep.subr.bf16.mxu0 0
  %976 = vmatpush1.bf16.msra.mxu0 0
  %977 = vmatprep.subr.bf16.mxu0 0
  %978 = vmatpush1.bf16.msra.mxu0 0
  %979 = vmatprep.subr.bf16.mxu0 0
  %980 = vmatpush1.bf16.msra.mxu0 0
  %981 = vmatprep.subr.bf16.mxu0 0
  %982 = vmatpush1.bf16.msra.mxu0 0
  %983 = vmatprep.subr.bf16.mxu0 0
  %984 = vmatpush1.bf16.msra.mxu0 0
  %985 = vmatprep.subr.bf16.mxu0 0
  %986 = vmatpush1.bf16.msra.mxu0 0
  %987 = vmatprep.subr.bf16.mxu0 0
  %988 = vmatpush1.bf16.msra.mxu0 0
  %989 = vmatprep.subr.bf16.mxu0 0
  %990 = vmatpush1.bf16.msra.mxu0 0
  %991 = vmatprep.mubr.bf16.mxu0 0
  %992 = vmatmul.mubr.bf16.gmra.mrb[0].mxu0 %v954
  %v993 = vpop.f32.mrb[0].mxu0
  %v994 = vadd.f32 0.0, %v993
  %v995 = vpop.f32.mrb[0].mxu0
  %v996 = vadd.f32 0.0, %v995
  %v997 = vpop.f32.mrb[0].mxu0
  %v998 = vpop.f32.mrb[0].mxu0
  %999 = vdwg.mxu0
  %1000 = vmatprep.subr.bf16.mxu0 %v580
  %1001 = vmatpush1.bf16.msra.mxu0 %v579
  %1002 = vmatprep.subr.bf16.mxu0 %v584
  %1003 = vmatpush1.bf16.msra.mxu0 %v583
  %1004 = vmatprep.subr.bf16.mxu0 %v588
  %1005 = vmatpush1.bf16.msra.mxu0 %v587
  %1006 = vmatprep.subr.bf16.mxu0 %v592
  %1007 = vmatpush1.bf16.msra.mxu0 %v591
  %1008 = vmatprep.subr.bf16.mxu0 %v596
  %1009 = vmatpush1.bf16.msra.mxu0 %v595
  %1010 = vmatprep.subr.bf16.mxu0 %v600
  %1011 = vmatpush1.bf16.msra.mxu0 %v599
  %1012 = vmatprep.subr.bf16.mxu0 %v604
  %1013 = vmatpush1.bf16.msra.mxu0 %v603
  %1014 = vmatprep.subr.bf16.mxu0 %v608
  %1015 = vmatpush1.bf16.msra.mxu0 %v607
  %1016 = vmatprep.subr.bf16.mxu0 0
  %1017 = vmatpush1.bf16.msra.mxu0 0
  %1018 = vmatprep.subr.bf16.mxu0 0
  %1019 = vmatpush1.bf16.msra.mxu0 0
  %1020 = vmatprep.subr.bf16.mxu0 0
  %1021 = vmatpush1.bf16.msra.mxu0 0
  %1022 = vmatprep.subr.bf16.mxu0 0
  %1023 = vmatpush1.bf16.msra.mxu0 0
  %1024 = vmatprep.subr.bf16.mxu0 0
  %1025 = vmatpush1.bf16.msra.mxu0 0
  %1026 = vmatprep.subr.bf16.mxu0 0
  %1027 = vmatpush1.bf16.msra.mxu0 0
  %1028 = vmatprep.subr.bf16.mxu0 0
  %1029 = vmatpush1.bf16.msra.mxu0 0
  %1030 = vmatprep.subr.bf16.mxu0 0
  %1031 = vmatpush1.bf16.msra.mxu0 0
  %1032 = vmatprep.mubr.bf16.mxu0 0
  %1033 = vmatmul.mubr.bf16.gmra.mrb[0].mxu0 %v954
  %v1034 = vpop.f32.mrb[0].mxu0
  %v1035 = vadd.f32 0.0, %v1034
  %v1036 = vpop.f32.mrb[0].mxu0
  %v1037 = vadd.f32 0.0, %v1036
  %v1038 = vpop.f32.mrb[0].mxu0
  %v1039 = vpop.f32.mrb[0].mxu0
  %1040 = vdwg.mxu0
  %v1041 = vadd.f32 %v955, %v994
  %v1042 = vadd.f32 %v956, %v996
  %v1043 = vadd.f32 %v957, %v1035
  %v1044 = vadd.f32 %v958, %v1037
  %v1045 = vtanh.pop %v1041
  %v1046 = vmul.f32 %v1045, 0.5
  %v1047 = vadd.f32 %v1046, 0.5
  %v1048 = vtanh.pop %v1042
  %v1049 = vmul.f32 %v1048, 0.5
  %v1050 = vadd.f32 %v1049, 0.5
  %v1051 = vtanh.pop %v1043
  %v1052 = vtanh.pop %v1044
  %v1053 = vmul.f32 %v1052, 0.5
  %v1054 = vadd.f32 %v1053, 0.5
  %v1055 = vmul.f32 %v1050, %v951
  %v1056 = vmul.f32 %v1047, %v1051
  %v1057 = vadd.f32 %v1055, %v1056
  %v1058 = vtanh.pop %v1057
  %v1059 = vmul.f32 %v1054, %v1058
  %v1060 = vpack.c.bf16 %v1059, %v1059
  %v1061 = vld [vmem:[#allocation2 + $0xa0] sm:$0xff]
  %v1062 = vld [vmem:[#allocation2 + $0xa8] sm:$0xff]
  %v1063 = vld [vmem:[#allocation2 + $0xb0] sm:$0xff]
  %v1064 = vld [vmem:[#allocation2 + $0xb8] sm:$0xff]
  %1065 = vmatprep.subr.bf16.mxu0 %v578
  %1066 = vmatpush1.bf16.msra.mxu0 %v577
  %1067 = vmatprep.subr.bf16.mxu0 %v582
  %1068 = vmatpush1.bf16.msra.mxu0 %v581
  %1069 = vmatprep.subr.bf16.mxu0 %v586
  %1070 = vmatpush1.bf16.msra.mxu0 %v585
  %1071 = vmatprep.subr.bf16.mxu0 %v590
  %1072 = vmatpush1.bf16.msra.mxu0 %v589
  %1073 = vmatprep.subr.bf16.mxu0 %v594
  %1074 = vmatpush1.bf16.msra.mxu0 %v593
  %1075 = vmatprep.subr.bf16.mxu0 %v598
  %1076 = vmatpush1.bf16.msra.mxu0 %v597
  %1077 = vmatprep.subr.bf16.mxu0 %v602
  %1078 = vmatpush1.bf16.msra.mxu0 %v601
  %1079 = vmatprep.subr.bf16.mxu0 %v606
  %1080 = vmatpush1.bf16.msra.mxu0 %v605
  %1081 = vmatprep.subr.bf16.mxu0 0
  %1082 = vmatpush1.bf16.msra.mxu0 0
  %1083 = vmatprep.subr.bf16.mxu0 0
  %1084 = vmatpush1.bf16.msra.mxu0 0
  %1085 = vmatprep.subr.bf16.mxu0 0
  %1086 = vmatpush1.bf16.msra.mxu0 0
  %1087 = vmatprep.subr.bf16.mxu0 0
  %1088 = vmatpush1.bf16.msra.mxu0 0
  %1089 = vmatprep.subr.bf16.mxu0 0
  %1090 = vmatpush1.bf16.msra.mxu0 0
  %1091 = vmatprep.subr.bf16.mxu0 0
  %1092 = vmatpush1.bf16.msra.mxu0 0
  %1093 = vmatprep.subr.bf16.mxu0 0
  %1094 = vmatpush1.bf16.msra.mxu0 0
  %1095 = vmatprep.subr.bf16.mxu0 0
  %1096 = vmatpush1.bf16.msra.mxu0 0
  %1097 = vmatprep.mubr.bf16.mxu0 0
  %1098 = vmatmul.mubr.bf16.gmra.mrb[0].mxu0 %v1060
  %v1099 = vpop.f32.mrb[0].mxu0
  %v1100 = vadd.f32 0.0, %v1099
  %v1101 = vpop.f32.mrb[0].mxu0
  %v1102 = vadd.f32 0.0, %v1101
  %v1103 = vpop.f32.mrb[0].mxu0
  %v1104 = vpop.f32.mrb[0].mxu0
  %1105 = vdwg.mxu0
  %1106 = vmatprep.subr.bf16.mxu0 %v580
  %1107 = vmatpush1.bf16.msra.mxu0 %v579
  %1108 = vmatprep.subr.bf16.mxu0 %v584
  %1109 = vmatpush1.bf16.msra.mxu0 %v583
  %1110 = vmatprep.subr.bf16.mxu0 %v588
  %1111 = vmatpush1.bf16.msra.mxu0 %v587
  %1112 = vmatprep.subr.bf16.mxu0 %v592
  %1113 = vmatpush1.bf16.msra.mxu0 %v591
  %1114 = vmatprep.subr.bf16.mxu0 %v596
  %1115 = vmatpush1.bf16.msra.mxu0 %v595
  %1116 = vmatprep.subr.bf16.mxu0 %v600
  %1117 = vmatpush1.bf16.msra.mxu0 %v599
  %1118 = vmatprep.subr.bf16.mxu0 %v604
  %1119 = vmatpush1.bf16.msra.mxu0 %v603
  %1120 = vmatprep.subr.bf16.mxu0 %v608
  %1121 = vmatpush1.bf16.msra.mxu0 %v607
  %1122 = vmatprep.subr.bf16.mxu0 0
  %1123 = vmatpush1.bf16.msra.mxu0 0
  %1124 = vmatprep.subr.bf16.mxu0 0
  %1125 = vmatpush1.bf16.msra.mxu0 0
  %1126 = vmatprep.subr.bf16.mxu0 0
  %1127 = vmatpush1.bf16.msra.mxu0 0
  %1128 = vmatprep.subr.bf16.mxu0 0
  %1129 = vmatpush1.bf16.msra.mxu0 0
  %1130 = vmatprep.subr.bf16.mxu0 0
  %1131 = vmatpush1.bf16.msra.mxu0 0
  %1132 = vmatprep.subr.bf16.mxu0 0
  %1133 = vmatpush1.bf16.msra.mxu0 0
  %1134 = vmatprep.subr.bf16.mxu0 0
  %1135 = vmatpush1.bf16.msra.mxu0 0
  %1136 = vmatprep.subr.bf16.mxu0 0
  %1137 = vmatpush1.bf16.msra.mxu0 0
  %1138 = vmatprep.mubr.bf16.mxu0 0
  %1139 = vmatmul.mubr.bf16.gmra.mrb[0].mxu0 %v1060
  %v1140 = vpop.f32.mrb[0].mxu0
  %v1141 = vadd.f32 0.0, %v1140
  %v1142 = vpop.f32.mrb[0].mxu0
  %v1143 = vadd.f32 0.0, %v1142
  %v1144 = vpop.f32.mrb[0].mxu0
  %v1145 = vpop.f32.mrb[0].mxu0
  %1146 = vdwg.mxu0
  %v1147 = vadd.f32 %v1061, %v1100
  %v1148 = vadd.f32 %v1062, %v1102
  %v1149 = vadd.f32 %v1063, %v1141
  %v1150 = vadd.f32 %v1064, %v1143
  %v1151 = vtanh.pop %v1147
  %v1152 = vmul.f32 %v1151, 0.5
  %v1153 = vadd.f32 %v1152, 0.5
  %v1154 = vtanh.pop %v1148
  %v1155 = vmul.f32 %v1154, 0.5
  %v1156 = vadd.f32 %v1155, 0.5
  %v1157 = vtanh.pop %v1149
  %v1158 = vtanh.pop %v1150
  %v1159 = vmul.f32 %v1158, 0.5
  %v1160 = vadd.f32 %v1159, 0.5
  %v1161 = vmul.f32 %v1156, %v1057
  %v1162 = vmul.f32 %v1153, %v1157
  %v1163 = vadd.f32 %v1161, %v1162
  %v1164 = vtanh.pop %v1163
  %v1165 = vmul.f32 %v1160, %v1164
  %v1166 = vpack.c.bf16 %v1165, %v1165
  %v1167 = vld [vmem:[#allocation2 + $0xc0] sm:$0xff]
  %v1168 = vld [vmem:[#allocation2 + $0xc8] sm:$0xff]
  %v1169 = vld [vmem:[#allocation2 + $0xd0] sm:$0xff]
  %v1170 = vld [vmem:[#allocation2 + $0xd8] sm:$0xff]
  %1171 = vmatprep.subr.bf16.mxu0 %v578
  %1172 = vmatpush1.bf16.msra.mxu0 %v577
  %1173 = vmatprep.subr.bf16.mxu0 %v582
  %1174 = vmatpush1.bf16.msra.mxu0 %v581
  %1175 = vmatprep.subr.bf16.mxu0 %v586
  %1176 = vmatpush1.bf16.msra.mxu0 %v585
  %1177 = vmatprep.subr.bf16.mxu0 %v590
  %1178 = vmatpush1.bf16.msra.mxu0 %v589
  %1179 = vmatprep.subr.bf16.mxu0 %v594
  %1180 = vmatpush1.bf16.msra.mxu0 %v593
  %1181 = vmatprep.subr.bf16.mxu0 %v598
  %1182 = vmatpush1.bf16.msra.mxu0 %v597
  %1183 = vmatprep.subr.bf16.mxu0 %v602
  %1184 = vmatpush1.bf16.msra.mxu0 %v601
  %1185 = vmatprep.subr.bf16.mxu0 %v606
  %1186 = vmatpush1.bf16.msra.mxu0 %v605
  %1187 = vmatprep.subr.bf16.mxu0 0
  %1188 = vmatpush1.bf16.msra.mxu0 0
  %1189 = vmatprep.subr.bf16.mxu0 0
  %1190 = vmatpush1.bf16.msra.mxu0 0
  %1191 = vmatprep.subr.bf16.mxu0 0
  %1192 = vmatpush1.bf16.msra.mxu0 0
  %1193 = vmatprep.subr.bf16.mxu0 0
  %1194 = vmatpush1.bf16.msra.mxu0 0
  %1195 = vmatprep.subr.bf16.mxu0 0
  %1196 = vmatpush1.bf16.msra.mxu0 0
  %1197 = vmatprep.subr.bf16.mxu0 0
  %1198 = vmatpush1.bf16.msra.mxu0 0
  %1199 = vmatprep.subr.bf16.mxu0 0
  %1200 = vmatpush1.bf16.msra.mxu0 0
  %1201 = vmatprep.subr.bf16.mxu0 0
  %1202 = vmatpush1.bf16.msra.mxu0 0
  %1203 = vmatprep.mubr.bf16.mxu0 0
  %1204 = vmatmul.mubr.bf16.gmra.mrb[0].mxu0 %v1166
  %v1205 = vpop.f32.mrb[0].mxu0
  %v1206 = vadd.f32 0.0, %v1205
  %v1207 = vpop.f32.mrb[0].mxu0
  %v1208 = vadd.f32 0.0, %v1207
  %v1209 = vpop.f32.mrb[0].mxu0
  %v1210 = vpop.f32.mrb[0].mxu0
  %1211 = vdwg.mxu0
  %1212 = vmatprep.subr.bf16.mxu0 %v580
  %1213 = vmatpush1.bf16.msra.mxu0 %v579
  %1214 = vmatprep.subr.bf16.mxu0 %v584
  %1215 = vmatpush1.bf16.msra.mxu0 %v583
  %1216 = vmatprep.subr.bf16.mxu0 %v588
  %1217 = vmatpush1.bf16.msra.mxu0 %v587
  %1218 = vmatprep.subr.bf16.mxu0 %v592
  %1219 = vmatpush1.bf16.msra.mxu0 %v591
  %1220 = vmatprep.subr.bf16.mxu0 %v596
  %1221 = vmatpush1.bf16.msra.mxu0 %v595
  %1222 = vmatprep.subr.bf16.mxu0 %v600
  %1223 = vmatpush1.bf16.msra.mxu0 %v599
  %1224 = vmatprep.subr.bf16.mxu0 %v604
  %1225 = vmatpush1.bf16.msra.mxu0 %v603
  %1226 = vmatprep.subr.bf16.mxu0 %v608
  %1227 = vmatpush1.bf16.msra.mxu0 %v607
  %1228 = vmatprep.subr.bf16.mxu0 0
  %1229 = vmatpush1.bf16.msra.mxu0 0
  %1230 = vmatprep.subr.bf16.mxu0 0
  %1231 = vmatpush1.bf16.msra.mxu0 0
  %1232 = vmatprep.subr.bf16.mxu0 0
  %1233 = vmatpush1.bf16.msra.mxu0 0
  %1234 = vmatprep.subr.bf16.mxu0 0
  %1235 = vmatpush1.bf16.msra.mxu0 0
  %1236 = vmatprep.subr.bf16.mxu0 0
  %1237 = vmatpush1.bf16.msra.mxu0 0
  %1238 = vmatprep.subr.bf16.mxu0 0
  %1239 = vmatpush1.bf16.msra.mxu0 0
  %1240 = vmatprep.subr.bf16.mxu0 0
  %1241 = vmatpush1.bf16.msra.mxu0 0
  %1242 = vmatprep.subr.bf16.mxu0 0
  %1243 = vmatpush1.bf16.msra.mxu0 0
  %1244 = vmatprep.mubr.bf16.mxu0 0
  %1245 = vmatmul.mubr.bf16.gmra.mrb[0].mxu0 %v1166
  %v1246 = vpop.f32.mrb[0].mxu0
  %v1247 = vadd.f32 0.0, %v1246
  %v1248 = vpop.f32.mrb[0].mxu0
  %v1249 = vadd.f32 0.0, %v1248
  %v1250 = vpop.f32.mrb[0].mxu0
  %v1251 = vpop.f32.mrb[0].mxu0
  %1252 = vdwg.mxu0
  %v1253 = vadd.f32 %v1167, %v1206
  %v1254 = vadd.f32 %v1168, %v1208
  %v1255 = vadd.f32 %v1169, %v1247
  %v1256 = vadd.f32 %v1170, %v1249
  %v1257 = vtanh.pop %v1253
  %v1258 = vmul.f32 %v1257, 0.5
  %v1259 = vadd.f32 %v1258, 0.5
  %v1260 = vtanh.pop %v1254
  %v1261 = vmul.f32 %v1260, 0.5
  %v1262 = vadd.f32 %v1261, 0.5
  %v1263 = vtanh.pop %v1255
  %v1264 = vtanh.pop %v1256
  %v1265 = vmul.f32 %v1264, 0.5
  %v1266 = vadd.f32 %v1265, 0.5
  %v1267 = vmul.f32 %v1262, %v1163
  %v1268 = vmul.f32 %v1259, %v1263
  %v1269 = vadd.f32 %v1267, %v1268
  %v1270 = vtanh.pop %v1269
  %v1271 = vmul.f32 %v1266, %v1270
  %v1272 = vpack.c.bf16 %v1271, %v1271
  %v1273 = vld [vmem:[#allocation2 + $0xe0] sm:$0xff]
  %v1274 = vld [vmem:[#allocation2 + $0xe8] sm:$0xff]
  %v1275 = vld [vmem:[#allocation2 + $0xf0] sm:$0xff]
  %v1276 = vld [vmem:[#allocation2 + $0xf8] sm:$0xff]
  %1277 = vmatprep.subr.bf16.mxu0 %v578
  %1278 = vmatpush1.bf16.msra.mxu0 %v577
  %1279 = vmatprep.subr.bf16.mxu0 %v582
  %1280 = vmatpush1.bf16.msra.mxu0 %v581
  %1281 = vmatprep.subr.bf16.mxu0 %v586
  %1282 = vmatpush1.bf16.msra.mxu0 %v585
  %1283 = vmatprep.subr.bf16.mxu0 %v590
  %1284 = vmatpush1.bf16.msra.mxu0 %v589
  %1285 = vmatprep.subr.bf16.mxu0 %v594
  %1286 = vmatpush1.bf16.msra.mxu0 %v593
  %1287 = vmatprep.subr.bf16.mxu0 %v598
  %1288 = vmatpush1.bf16.msra.mxu0 %v597
  %1289 = vmatprep.subr.bf16.mxu0 %v602
  %1290 = vmatpush1.bf16.msra.mxu0 %v601
  %1291 = vmatprep.subr.bf16.mxu0 %v606
  %1292 = vmatpush1.bf16.msra.mxu0 %v605
  %1293 = vmatprep.subr.bf16.mxu0 0
  %1294 = vmatpush1.bf16.msra.mxu0 0
  %1295 = vmatprep.subr.bf16.mxu0 0
  %1296 = vmatpush1.bf16.msra.mxu0 0
  %1297 = vmatprep.subr.bf16.mxu0 0
  %1298 = vmatpush1.bf16.msra.mxu0 0
  %1299 = vmatprep.subr.bf16.mxu0 0
  %1300 = vmatpush1.bf16.msra.mxu0 0
  %1301 = vmatprep.subr.bf16.mxu0 0
  %1302 = vmatpush1.bf16.msra.mxu0 0
  %1303 = vmatprep.subr.bf16.mxu0 0
  %1304 = vmatpush1.bf16.msra.mxu0 0
  %1305 = vmatprep.subr.bf16.mxu0 0
  %1306 = vmatpush1.bf16.msra.mxu0 0
  %1307 = vmatprep.subr.bf16.mxu0 0
  %1308 = vmatpush1.bf16.msra.mxu0 0
  %1309 = vmatprep.mubr.bf16.mxu0 0
  %1310 = vmatmul.mubr.bf16.gmra.mrb[0].mxu0 %v1272
  %v1311 = vpop.f32.mrb[0].mxu0
  %v1312 = vadd.f32 0.0, %v1311
  %v1313 = vpop.f32.mrb[0].mxu0
  %v1314 = vadd.f32 0.0, %v1313
  %v1315 = vpop.f32.mrb[0].mxu0
  %v1316 = vpop.f32.mrb[0].mxu0
  %1317 = vdwg.mxu0
  %1318 = vmatprep.subr.bf16.mxu0 %v580
  %1319 = vmatpush1.bf16.msra.mxu0 %v579
  %1320 = vmatprep.subr.bf16.mxu0 %v584
  %1321 = vmatpush1.bf16.msra.mxu0 %v583
  %1322 = vmatprep.subr.bf16.mxu0 %v588
  %1323 = vmatpush1.bf16.msra.mxu0 %v587
  %1324 = vmatprep.subr.bf16.mxu0 %v592
  %1325 = vmatpush1.bf16.msra.mxu0 %v591
  %1326 = vmatprep.subr.bf16.mxu0 %v596
  %1327 = vmatpush1.bf16.msra.mxu0 %v595
  %1328 = vmatprep.subr.bf16.mxu0 %v600
  %1329 = vmatpush1.bf16.msra.mxu0 %v599
  %1330 = vmatprep.subr.bf16.mxu0 %v604
  %1331 = vmatpush1.bf16.msra.mxu0 %v603
  %1332 = vmatprep.subr.bf16.mxu0 %v608
  %1333 = vmatpush1.bf16.msra.mxu0 %v607
  %1334 = vmatprep.subr.bf16.mxu0 0
  %1335 = vmatpush1.bf16.msra.mxu0 0
  %1336 = vmatprep.subr.bf16.mxu0 0
  %1337 = vmatpush1.bf16.msra.mxu0 0
  %1338 = vmatprep.subr.bf16.mxu0 0
  %1339 = vmatpush1.bf16.msra.mxu0 0
  %1340 = vmatprep.subr.bf16.mxu0 0
  %1341 = vmatpush1.bf16.msra.mxu0 0
  %1342 = vmatprep.subr.bf16.mxu0 0
  %1343 = vmatpush1.bf16.msra.mxu0 0
  %1344 = vmatprep.subr.bf16.mxu0 0
  %1345 = vmatpush1.bf16.msra.mxu0 0
  %1346 = vmatprep.subr.bf16.mxu0 0
  %1347 = vmatpush1.bf16.msra.mxu0 0
  %1348 = vmatprep.subr.bf16.mxu0 0
  %1349 = vmatpush1.bf16.msra.mxu0 0
  %1350 = vmatprep.mubr.bf16.mxu0 0
  %1351 = vmatmul.mubr.bf16.gmra.mrb[0].mxu0 %v1272
  %v1352 = vpop.f32.mrb[0].mxu0
  %v1353 = vadd.f32 0.0, %v1352
  %v1354 = vpop.f32.mrb[0].mxu0
  %v1355 = vadd.f32 0.0, %v1354
  %v1356 = vpop.f32.mrb[0].mxu0
  %v1357 = vpop.f32.mrb[0].mxu0
  %1358 = vdwg.mxu0
  %v1359 = vadd.f32 %v1273, %v1312
  %v1360 = vadd.f32 %v1274, %v1314
  %v1361 = vadd.f32 %v1275, %v1353
  %v1362 = vadd.f32 %v1276, %v1355
  %v1363 = vtanh.pop %v1359
  %v1364 = vmul.f32 %v1363, 0.5
  %v1365 = vadd.f32 %v1364, 0.5
  %v1366 = vtanh.pop %v1360
  %v1367 = vmul.f32 %v1366, 0.5
  %v1368 = vadd.f32 %v1367, 0.5
  %v1369 = vtanh.pop %v1361
  %v1370 = vtanh.pop %v1362
  %v1371 = vmul.f32 %v1370, 0.5
  %v1372 = vadd.f32 %v1371, 0.5
  %v1373 = vmul.f32 %v1368, %v1269
  %v1374 = vmul.f32 %v1365, %v1369
  %v1375 = vadd.f32 %v1373, %v1374
  %v1376 = vtanh.pop %v1375
  %v1377 = vmul.f32 %v1372, %v1376
  %v1378 = vpack.c.bf16 %v1377, %v1377
  %v1379 = vunpack.c.l.bf16 %v1378
  %v1380 = vld [vmem:[%s3] sm:$0x1]
  %v1382 = vlaneseq
  %v1383 = vshrl.u32 %v1382, 7
  %v1384 = vsub.s32 0, %v1383
  %v1385 = vrot.slane %v1380, %v1384
  %v1387 = vmul.f32 %v1379, %v1385
  %1388 = vadd.xlane.f32.xlu0 %v1387
  %v1389 = vpop.xlane.xlu0 %1388
  %v1390 = vld [vmem:[#allocation3] sm:$0x1]
  %v1392 = vlaneseq
  %v1393 = vshrl.u32 %v1392, 7
  %v1394 = vsub.s32 0, %v1393
  %v1395 = vrot.slane %v1390, %v1394
  %v1397 = vadd.f32 %v1389, %v1395
  %1399 = vset.pattern.permute.xlu0 0
  %1400 = vperm.xlu0 %1399, %v1397
  %v1401 = vpop.permute.xlu0 %1400
  %1403 = vst [vmem:[%s5] sm:$0xff] %v1401
  // Predicated region
  $region22: #{lstm_forward.1} parent=0 // pred_check
    _
  $region23: #{lstm_forward.1} parent=0 // pred_check_branch
    %1405 = sbr.rel (0) target = $region25
  $region24: #{lstm_forward.1} parent=0 // pred_region
    _
  $region25: #{lstm_forward.1} parent=0 // pred_fallthru
    _
  // Predicated region
  $region26: #{lstm_forward.1} parent=0 // pred_check
    _
  $region27: #{lstm_forward.1} parent=0 // pred_check_branch
    %1407 = sbr.rel (0) target = $region29
  $region28: #{lstm_forward.1} parent=0 // pred_region
    _
  $region29: #{lstm_forward.1} parent=0 // pred_fallthru
    _

</llo_original>
